<compile_context>
chip_gen: v7x
topology: tpu7x:2x2x1
jax: 0.10.0
libtpu: 0.0.40
codegen_flags: <defaults>
</compile_context>

<pallas_src>
import jax
import jax.numpy as jnp
from jax import lax
from jax.experimental import pallas as pl
from jax.experimental.pallas import tpu as pltpu


def hfc_kernel(x_ref, w1_ref, b1_ref, w2_ref, b2_ref,
               wd_ref, bd_ref, ws_ref, bs_ref,
               strong_ref, weak_ref,
               num_acc, den_acc):
    t = pl.program_id(1)

    @pl.when(t == 0)
    def _():
        num_acc[...] = jnp.zeros_like(num_acc)
        den_acc[...] = jnp.zeros_like(den_acc)

    # ---- MLP trunk: bf16 MXU matmuls, f32 accumulation --------------------
    x = jnp.maximum(x_ref[0], 0.0)                                  # ReLU [tT, 768] bf16
    h1 = jnp.dot(x, w1_ref[...], preferred_element_type=jnp.float32) + b1_ref[...]
    h2 = jnp.dot(h1.astype(jnp.bfloat16), w2_ref[...],
                 preferred_element_type=jnp.float32) + b2_ref[...]
    h2b = h2.astype(jnp.bfloat16)                                   # [tT, 64]

    # ---- class heads, lane-dense [C_pad, tT] -------------------------------
    strong = jax.nn.sigmoid(
        lax.dot_general(wd_ref[...], h2b, (((0,), (1,)), ((), ())),
                        preferred_element_type=jnp.float32) + bd_ref[...])
    logits = lax.dot_general(ws_ref[...], h2b, (((0,), (1,)), ((), ())),
                             preferred_element_type=jnp.float32) + bs_ref[...]

    # softmax over classes (axis 0, padded cols have -1e9 bias -> exp ~ 0) + clamp
    m = jnp.max(logits, axis=0, keepdims=True)
    e = jnp.exp(logits - m)
    sof = e / jnp.sum(e, axis=0, keepdims=True)
    sof = jnp.clip(sof, 1e-7, 1.0)

    # attention pooling over time, accumulated across T tiles
    num_acc[...] += jnp.sum(strong * sof, axis=1, keepdims=True)
    den_acc[...] += jnp.sum(sof, axis=1, keepdims=True)

    strong_ref[0] = strong.astype(strong_ref.dtype)                 # lane-dense store

    @pl.when(t == pl.num_programs(1) - 1)
    def _():
        weak_ref[0] = (num_acc[...] / den_acc[...]).astype(weak_ref.dtype)


def _pick_time_tile(T):
    for cand in (512, 256, 128):
        if T % cand == 0:
            return cand
    return T


def hfc_forward(x, params, tT=None):
    """x: [B, T, 768] HuBERT features. Returns (strong [B,nclass,T], weak [B,nclass])."""
    B, T, F = x.shape
    w1, b1, w2, b2, wd, bd, ws, bs = params
    nclass = wd.shape[1]
    C = ((nclass + 7) // 8) * 8          # pad class dim to a sublane multiple

    if tT is None:
        tT = _pick_time_tile(T)
    assert T % tT == 0, "T must be divisible by the time tile"

    bf16, f32 = jnp.bfloat16, jnp.float32

    # bf16 activations/weights for the MXU; biases stay f32.
    xb = x.astype(bf16)
    w1b, w2b = w1.astype(bf16), w2.astype(bf16)

    # Class heads padded to C, biases transposed to [C, 1] (class on sublanes).
    wdp = jnp.zeros((w2.shape[1], C), bf16).at[:, :nclass].set(wd.astype(bf16))
    wsp = jnp.zeros((w2.shape[1], C), bf16).at[:, :nclass].set(ws.astype(bf16))
    bdp = jnp.zeros((C, 1), f32).at[:nclass, 0].set(bd.reshape(-1).astype(f32))
    # padded softmax columns -> very negative bias so exp() -> 0 and real
    # class probabilities are unchanged; padded rows are sliced off below.
    bsp = jnp.full((C, 1), -1e9, f32).at[:nclass, 0].set(bs.reshape(-1).astype(f32))

    full = lambda a: pl.BlockSpec(a.shape, lambda b, t: (0, 0))

    strong_pad, weak_pad = pl.pallas_call(
        hfc_kernel,
        out_shape=(
            jax.ShapeDtypeStruct((B, C, T), f32),
            jax.ShapeDtypeStruct((B, C, 1), f32),
        ),
        grid_spec=pltpu.PrefetchScalarGridSpec(
            num_scalar_prefetch=0,
            grid=(B, T // tT),
            in_specs=[
                pl.BlockSpec((1, tT, F), lambda b, t: (b, t, 0)),   # features
                full(w1b), full(b1),
                full(w2b), full(b2),
                full(wdp), full(bdp),
                full(wsp), full(bsp),
            ],
            out_specs=[
                pl.BlockSpec((1, C, tT), lambda b, t: (b, 0, t)),   # strong [C, T] slices
                pl.BlockSpec((1, C, 1), lambda b, t: (b, 0, 0)),    # weak (written at last t)
            ],
            scratch_shapes=[
                pltpu.VMEM((C, 1), f32),    # attention-pool numerator
                pltpu.VMEM((C, 1), f32),    # attention-pool denominator
            ],
        ),
        compiler_params=pltpu.CompilerParams(
            dimension_semantics=("parallel", "arbitrary")),
    )(xb, w1b, b1, w2b, b2, wdp, bdp, wsp, bsp)

    strong = strong_pad[:, :nclass, :]     # [B, nclass, T]  (already transposed)
    weak = weak_pad[:, :nclass, 0]         # [B, nclass]
    return strong, weak


def init_params(key, nclass=10):
    """Deterministic synthetic parameters matching the module's Linear shapes."""
    ks = jax.random.split(key, 8)

    def lin(kw, kb, fan_in, fan_out):
        s = 1.0 / jnp.sqrt(fan_in)
        w = jax.random.uniform(kw, (fan_in, fan_out), jnp.float32, -s, s)
        b = jax.random.uniform(kb, (1, fan_out), jnp.float32, -s, s)
        return w, b

    w1, b1 = lin(ks[0], ks[1], 768, 256)    # fc1
    w2, b2 = lin(ks[2], ks[3], 256, 64)     # fc2
    wd, bd = lin(ks[4], ks[5], 64, nclass)  # dense
    ws, bs = lin(ks[6], ks[7], 64, nclass)  # dense_softmax
    return (w1, b1, w2, b2, wd, bd, ws, bs)


def reference_forward(x, params):
    """Pure-JAX reference mirroring the PyTorch forward (eval mode, no pad_mask),
    with the same bf16-operand / f32-accumulate matmul precision as the kernel."""
    w1, b1, w2, b2, wd, bd, ws, bs = params
    bf16 = jnp.bfloat16
    h = jnp.maximum(x.astype(bf16), 0.0)
    h1 = jnp.dot(h, w1.astype(bf16), preferred_element_type=jnp.float32) + b1
    h2 = jnp.dot(h1.astype(bf16), w2.astype(bf16),
                 preferred_element_type=jnp.float32) + b2
    h2b = h2.astype(bf16)
    strong = jax.nn.sigmoid(
        jnp.dot(h2b, wd.astype(bf16), preferred_element_type=jnp.float32) + bd)
    logits = jnp.dot(h2b, ws.astype(bf16), preferred_element_type=jnp.float32) + bs
    sof = jax.nn.softmax(logits, axis=-1)
    sof = jnp.clip(sof, 1e-7, 1.0)
    weak = (strong * sof).sum(1) / sof.sum(1)
    return jnp.transpose(strong, (0, 2, 1)), weak


if __name__ == "__main__":
    key = jax.random.PRNGKey(0)
    kx, kp = jax.random.split(key)

    B, T, F, NCLASS = 2, 256, 768, 10
    x = jax.random.normal(kx, (B, T, F), jnp.float32)   # synthetic HuBERT features
    params = init_params(kp, nclass=NCLASS)

    # tT=128 -> grid (B, 2): exercises the multi-step weak-accumulator path.
    strong, weak = hfc_forward(x, params, tT=128)
    strong = jax.block_until_ready(strong)
    weak = jax.block_until_ready(weak)

    strong_ref, weak_ref = reference_forward(x, params)
    assert strong.shape == (B, NCLASS, T) and weak.shape == (B, NCLASS)
    assert jnp.allclose(strong, strong_ref, atol=2e-3, rtol=2e-3)
    assert jnp.allclose(weak, weak_ref, atol=2e-3, rtol=2e-3)

    print("KERNEL_OK")
</pallas_src>

<mosaic_0001>
module attributes {stable_mosaic.version = 11 : i64} {
  func.func @hfc_kernel(%arg0: i32, %arg1: i32, %arg2: memref<1x128x768xbf16, #tpu.memory_space<vmem>>, %arg3: memref<768x256xbf16, #tpu.memory_space<vmem>>, %arg4: memref<1x256xf32, #tpu.memory_space<vmem>>, %arg5: memref<256x64xbf16, #tpu.memory_space<vmem>>, %arg6: memref<1x64xf32, #tpu.memory_space<vmem>>, %arg7: memref<64x16xbf16, #tpu.memory_space<vmem>>, %arg8: memref<16x1xf32, #tpu.memory_space<vmem>>, %arg9: memref<64x16xbf16, #tpu.memory_space<vmem>>, %arg10: memref<16x1xf32, #tpu.memory_space<vmem>>, %arg11: memref<1x16x128xf32, #tpu.memory_space<vmem>>, %arg12: memref<1x16x1xf32, #tpu.memory_space<vmem>>, %arg13: memref<16x1xf32, #tpu.memory_space<vmem>>, %arg14: memref<16x1xf32, #tpu.memory_space<vmem>>) attributes {dimension_semantics = [#tpu.dimension_semantics<parallel>, #tpu.dimension_semantics<arbitrary>], iteration_bounds = array<i64: 2, 2>, scalar_prefetch = 0 : i64, scratch_operands = 2 : i64, tpu.core_type = #tpu.core_type<tc>, window_params = [{transform_indices = @transform_0, window_bounds = array<i64: 1, 128, 768>}, {pipeline_mode = #tpu.pipeline_mode<synchronous>, transform_indices = @transform_1, window_bounds = array<i64: 768, 256>}, {pipeline_mode = #tpu.pipeline_mode<synchronous>, transform_indices = @transform_2, window_bounds = array<i64: 1, 256>}, {pipeline_mode = #tpu.pipeline_mode<synchronous>, transform_indices = @transform_3, window_bounds = array<i64: 256, 64>}, {pipeline_mode = #tpu.pipeline_mode<synchronous>, transform_indices = @transform_4, window_bounds = array<i64: 1, 64>}, {pipeline_mode = #tpu.pipeline_mode<synchronous>, transform_indices = @transform_5, window_bounds = array<i64: 64, 16>}, {pipeline_mode = #tpu.pipeline_mode<synchronous>, transform_indices = @transform_6, window_bounds = array<i64: 16, 1>}, {pipeline_mode = #tpu.pipeline_mode<synchronous>, transform_indices = @transform_7, window_bounds = array<i64: 64, 16>}, {pipeline_mode = #tpu.pipeline_mode<synchronous>, transform_indices = @transform_8, window_bounds = array<i64: 16, 1>}, {transform_indices = @transform_9, window_bounds = array<i64: 1, 16, 128>}, {transform_indices = @transform_10, window_bounds = array<i64: 1, 16, 1>}]} {
    %c0_i32 = arith.constant 0 : i32
    %0 = arith.cmpi eq, %arg1, %c0_i32 : i32
    %1 = arith.extui %0 : i1 to i32
    %c0_i32_0 = arith.constant 0 : i32
    %2 = arith.cmpi ne, %1, %c0_i32_0 : i32
    scf.if %2 {
      %cst_42 = arith.constant 0.000000e+00 : f32
      %64 = vector.broadcast %cst_42 : f32 to vector<16x1xf32>
      %c0_43 = arith.constant 0 : index
      %c0_44 = arith.constant 0 : index
      %65 = vector.load %arg13[%c0_43, %c0_44] : memref<16x1xf32, #tpu.memory_space<vmem>>, vector<16x1xf32>
      tpu.vector_store %arg13[%c0_43, %c0_44], %64 {strides = array<i32>} : memref<16x1xf32, #tpu.memory_space<vmem>>, vector<16x1xf32>,
      %cst_45 = arith.constant 0.000000e+00 : f32
      %66 = vector.broadcast %cst_45 : f32 to vector<16x1xf32>
      %c0_46 = arith.constant 0 : index
      %c0_47 = arith.constant 0 : index
      %67 = vector.load %arg14[%c0_46, %c0_47] : memref<16x1xf32, #tpu.memory_space<vmem>>, vector<16x1xf32>
      tpu.vector_store %arg14[%c0_46, %c0_47], %66 {strides = array<i32>} : memref<16x1xf32, #tpu.memory_space<vmem>>, vector<16x1xf32>,
    } else {
    }
    %c0 = arith.constant 0 : index
    %c0_1 = arith.constant 0 : index
    %c0_2 = arith.constant 0 : index
    %3 = vector.load %arg2[%c0, %c0_1, %c0_2] : memref<1x128x768xbf16, #tpu.memory_space<vmem>>, vector<1x128x768xbf16>
    %4 = vector.shape_cast %3 : vector<1x128x768xbf16> to vector<128x768xbf16>
    %cst = arith.constant 0.000000e+00 : bf16
    %5 = vector.broadcast %cst : bf16 to vector<128x768xbf16>
    %6 = arith.maximumf %4, %5 : vector<128x768xbf16>
    %c0_3 = arith.constant 0 : index
    %c0_4 = arith.constant 0 : index
    %7 = vector.load %arg3[%c0_3, %c0_4] : memref<768x256xbf16, #tpu.memory_space<vmem>>, vector<768x256xbf16>
    %cst_5 = arith.constant dense<0.000000e+00> : vector<128x256xf32>
    %8 = tpu.matmul %6, %7, %cst_5 {dimension_numbers = #tpu.dot_dimension_numbers<[1], [0], [0], [1], [0, 0, 1, 1], [], []>} : vector<128x768xbf16>, vector<768x256xbf16>, vector<128x256xf32> -> vector<128x256xf32>
    %c0_6 = arith.constant 0 : index
    %c0_7 = arith.constant 0 : index
    %9 = vector.load %arg4[%c0_6, %c0_7] : memref<1x256xf32, #tpu.memory_space<vmem>>, vector<1x256xf32>
    %10 = vector.broadcast %9 : vector<1x256xf32> to vector<128x256xf32>
    %11 = arith.addf %8, %10 : vector<128x256xf32>
    %12 = arith.truncf %11 : vector<128x256xf32> to vector<128x256xbf16>
    %c0_8 = arith.constant 0 : index
    %c0_9 = arith.constant 0 : index
    %13 = vector.load %arg5[%c0_8, %c0_9] : memref<256x64xbf16, #tpu.memory_space<vmem>>, vector<256x64xbf16>
    %cst_10 = arith.constant dense<0.000000e+00> : vector<128x64xf32>
    %14 = tpu.matmul %12, %13, %cst_10 {dimension_numbers = #tpu.dot_dimension_numbers<[1], [0], [0], [1], [0, 0, 1, 1], [], []>} : vector<128x256xbf16>, vector<256x64xbf16>, vector<128x64xf32> -> vector<128x64xf32>
    %c0_11 = arith.constant 0 : index
    %c0_12 = arith.constant 0 : index
    %15 = vector.load %arg6[%c0_11, %c0_12] : memref<1x64xf32, #tpu.memory_space<vmem>>, vector<1x64xf32>
    %16 = vector.broadcast %15 : vector<1x64xf32> to vector<128x64xf32>
    %17 = arith.addf %14, %16 : vector<128x64xf32>
    %18 = arith.truncf %17 : vector<128x64xf32> to vector<128x64xbf16>
    %c0_13 = arith.constant 0 : index
    %c0_14 = arith.constant 0 : index
    %19 = vector.load %arg7[%c0_13, %c0_14] : memref<64x16xbf16, #tpu.memory_space<vmem>>, vector<64x16xbf16>
    %cst_15 = arith.constant dense<0.000000e+00> : vector<16x128xf32>
    %20 = tpu.matmul %19, %18, %cst_15 {dimension_numbers = #tpu.dot_dimension_numbers<[0], [1], [1], [0], [0, 1, 1, 0], [], []>} : vector<64x16xbf16>, vector<128x64xbf16>, vector<16x128xf32> -> vector<16x128xf32>
    %c0_16 = arith.constant 0 : index
    %c0_17 = arith.constant 0 : index
    %21 = vector.load %arg8[%c0_16, %c0_17] : memref<16x1xf32, #tpu.memory_space<vmem>>, vector<16x1xf32>
    %22 = vector.broadcast %21 : vector<16x1xf32> to vector<16x128xf32>
    %23 = arith.addf %20, %22 : vector<16x128xf32>
    %24 = arith.negf %23 : vector<16x128xf32>
    %25 = math.exp %24 : vector<16x128xf32>
    %cst_18 = arith.constant 1.000000e+00 : f32
    %26 = vector.broadcast %cst_18 : f32 to vector<16x128xf32>
    %27 = arith.addf %26, %25 : vector<16x128xf32>
    %28 = arith.divf %26, %27 : vector<16x128xf32>
    %c0_19 = arith.constant 0 : index
    %c0_20 = arith.constant 0 : index
    %29 = vector.load %arg9[%c0_19, %c0_20] : memref<64x16xbf16, #tpu.memory_space<vmem>>, vector<64x16xbf16>
    %cst_21 = arith.constant dense<0.000000e+00> : vector<16x128xf32>
    %30 = tpu.matmul %29, %18, %cst_21 {dimension_numbers = #tpu.dot_dimension_numbers<[0], [1], [1], [0], [0, 1, 1, 0], [], []>} : vector<64x16xbf16>, vector<128x64xbf16>, vector<16x128xf32> -> vector<16x128xf32>
    %c0_22 = arith.constant 0 : index
    %c0_23 = arith.constant 0 : index
    %31 = vector.load %arg10[%c0_22, %c0_23] : memref<16x1xf32, #tpu.memory_space<vmem>>, vector<16x1xf32>
    %32 = vector.broadcast %31 : vector<16x1xf32> to vector<16x128xf32>
    %33 = arith.addf %30, %32 : vector<16x128xf32>
    %cst_24 = arith.constant dense<0xFF800000> : vector<128xf32>
    %34 = vector.multi_reduction <maximumf>, %33, %cst_24 [0] : vector<16x128xf32> to vector<128xf32>
    %35 = vector.shape_cast %34 : vector<128xf32> to vector<1x128xf32>
    %36 = vector.broadcast %35 : vector<1x128xf32> to vector<16x128xf32>
    %37 = arith.subf %33, %36 : vector<16x128xf32>
    %38 = math.exp %37 : vector<16x128xf32>
    %cst_25 = arith.constant dense<0.000000e+00> : vector<128xf32>
    %39 = vector.multi_reduction <add>, %38, %cst_25 [0] : vector<16x128xf32> to vector<128xf32>
    %40 = vector.shape_cast %39 : vector<128xf32> to vector<1x128xf32>
    %41 = vector.broadcast %40 : vector<1x128xf32> to vector<16x128xf32>
    %42 = arith.divf %38, %41 : vector<16x128xf32>
    %cst_26 = arith.constant 1.000000e-07 : f32
    %cst_27 = arith.constant 1.000000e+00 : f32
    %43 = vector.broadcast %cst_26 : f32 to vector<16x128xf32>
    %44 = arith.maximumf %43, %42 : vector<16x128xf32>
    %45 = vector.broadcast %cst_27 : f32 to vector<16x128xf32>
    %46 = arith.minimumf %45, %44 : vector<16x128xf32>
    %c0_28 = arith.constant 0 : index
    %c0_29 = arith.constant 0 : index
    %47 = vector.load %arg13[%c0_28, %c0_29] : memref<16x1xf32, #tpu.memory_space<vmem>>, vector<16x1xf32>
    %48 = arith.mulf %28, %46 : vector<16x128xf32>
    %cst_30 = arith.constant dense<0.000000e+00> : vector<16xf32>
    %49 = vector.multi_reduction <add>, %48, %cst_30 [1] : vector<16x128xf32> to vector<16xf32>
    %50 = vector.shape_cast %49 : vector<16xf32> to vector<16x1xf32>
    %51 = arith.addf %47, %50 : vector<16x1xf32>
    %c0_31 = arith.constant 0 : index
    %c0_32 = arith.constant 0 : index
    %52 = vector.load %arg13[%c0_31, %c0_32] : memref<16x1xf32, #tpu.memory_space<vmem>>, vector<16x1xf32>
    tpu.vector_store %arg13[%c0_31, %c0_32], %51 {strides = array<i32>} : memref<16x1xf32, #tpu.memory_space<vmem>>, vector<16x1xf32>,
    %c0_33 = arith.constant 0 : index
    %c0_34 = arith.constant 0 : index
    %53 = vector.load %arg14[%c0_33, %c0_34] : memref<16x1xf32, #tpu.memory_space<vmem>>, vector<16x1xf32>
    %cst_35 = arith.constant dense<0.000000e+00> : vector<16xf32>
    %54 = vector.multi_reduction <add>, %46, %cst_35 [1] : vector<16x128xf32> to vector<16xf32>
    %55 = vector.shape_cast %54 : vector<16xf32> to vector<16x1xf32>
    %56 = arith.addf %53, %55 : vector<16x1xf32>
    %c0_36 = arith.constant 0 : index
    %c0_37 = arith.constant 0 : index
    %57 = vector.load %arg14[%c0_36, %c0_37] : memref<16x1xf32, #tpu.memory_space<vmem>>, vector<16x1xf32>
    tpu.vector_store %arg14[%c0_36, %c0_37], %56 {strides = array<i32>} : memref<16x1xf32, #tpu.memory_space<vmem>>, vector<16x1xf32>,
    %c0_38 = arith.constant 0 : index
    %c0_39 = arith.constant 0 : index
    %c0_40 = arith.constant 0 : index
    %58 = vector.load %arg11[%c0_38, %c0_39, %c0_40] : memref<1x16x128xf32, #tpu.memory_space<vmem>>, vector<1x16x128xf32>
    %59 = vector.shape_cast %58 : vector<1x16x128xf32> to vector<16x128xf32>
    %60 = vector.shape_cast %28 : vector<16x128xf32> to vector<1x16x128xf32>
    tpu.vector_store %arg11[%c0_38, %c0_39, %c0_40], %60 {strides = array<i32>} : memref<1x16x128xf32, #tpu.memory_space<vmem>>, vector<1x16x128xf32>,
    %c1_i32 = arith.constant 1 : i32
    %61 = arith.cmpi eq, %arg1, %c1_i32 : i32
    %62 = arith.extui %61 : i1 to i32
    %c0_i32_41 = arith.constant 0 : i32
    %63 = arith.cmpi ne, %62, %c0_i32_41 : i32
    scf.if %63 {
      %c0_42 = arith.constant 0 : index
      %c0_43 = arith.constant 0 : index
      %64 = vector.load %arg13[%c0_42, %c0_43] : memref<16x1xf32, #tpu.memory_space<vmem>>, vector<16x1xf32>
      %c0_44 = arith.constant 0 : index
      %c0_45 = arith.constant 0 : index
      %65 = vector.load %arg14[%c0_44, %c0_45] : memref<16x1xf32, #tpu.memory_space<vmem>>, vector<16x1xf32>
      %66 = arith.divf %64, %65 : vector<16x1xf32>
      %c0_46 = arith.constant 0 : index
      %c0_47 = arith.constant 0 : index
      %c0_48 = arith.constant 0 : index
      %67 = vector.load %arg12[%c0_46, %c0_47, %c0_48] : memref<1x16x1xf32, #tpu.memory_space<vmem>>, vector<1x16x1xf32>
      %68 = vector.shape_cast %67 : vector<1x16x1xf32> to vector<16x1xf32>
      %69 = vector.shape_cast %66 : vector<16x1xf32> to vector<1x16x1xf32>
      tpu.vector_store %arg12[%c0_46, %c0_47, %c0_48], %69 {strides = array<i32>} : memref<1x16x1xf32, #tpu.memory_space<vmem>>, vector<1x16x1xf32>,
    } else {
    }
    return
  }
  func.func @transform_0(%arg0: i32, %arg1: i32) -> (i32, i32, i32) {
    %c0_i32 = arith.constant 0 : i32
    %c0_i32_0 = arith.constant 0 : i32
    return %arg0, %arg1, %c0_i32 : i32, i32, i32
  }
  func.func @transform_1(%arg0: i32, %arg1: i32) -> (i32, i32) {
    %c0_i32 = arith.constant 0 : i32
    %c0_i32_0 = arith.constant 0 : i32
    %c0_i32_1 = arith.constant 0 : i32
    return %c0_i32, %c0_i32_0 : i32, i32
  }
  func.func @transform_2(%arg0: i32, %arg1: i32) -> (i32, i32) {
    %c0_i32 = arith.constant 0 : i32
    %c0_i32_0 = arith.constant 0 : i32
    %c0_i32_1 = arith.constant 0 : i32
    return %c0_i32, %c0_i32_0 : i32, i32
  }
  func.func @transform_3(%arg0: i32, %arg1: i32) -> (i32, i32) {
    %c0_i32 = arith.constant 0 : i32
    %c0_i32_0 = arith.constant 0 : i32
    %c0_i32_1 = arith.constant 0 : i32
    return %c0_i32, %c0_i32_0 : i32, i32
  }
  func.func @transform_4(%arg0: i32, %arg1: i32) -> (i32, i32) {
    %c0_i32 = arith.constant 0 : i32
    %c0_i32_0 = arith.constant 0 : i32
    %c0_i32_1 = arith.constant 0 : i32
    return %c0_i32, %c0_i32_0 : i32, i32
  }
  func.func @transform_5(%arg0: i32, %arg1: i32) -> (i32, i32) {
    %c0_i32 = arith.constant 0 : i32
    %c0_i32_0 = arith.constant 0 : i32
    %c0_i32_1 = arith.constant 0 : i32
    return %c0_i32, %c0_i32_0 : i32, i32
  }
  func.func @transform_6(%arg0: i32, %arg1: i32) -> (i32, i32) {
    %c0_i32 = arith.constant 0 : i32
    %c0_i32_0 = arith.constant 0 : i32
    %c0_i32_1 = arith.constant 0 : i32
    return %c0_i32, %c0_i32_0 : i32, i32
  }
  func.func @transform_7(%arg0: i32, %arg1: i32) -> (i32, i32) {
    %c0_i32 = arith.constant 0 : i32
    %c0_i32_0 = arith.constant 0 : i32
    %c0_i32_1 = arith.constant 0 : i32
    return %c0_i32, %c0_i32_0 : i32, i32
  }
  func.func @transform_8(%arg0: i32, %arg1: i32) -> (i32, i32) {
    %c0_i32 = arith.constant 0 : i32
    %c0_i32_0 = arith.constant 0 : i32
    %c0_i32_1 = arith.constant 0 : i32
    return %c0_i32, %c0_i32_0 : i32, i32
  }
  func.func @transform_9(%arg0: i32, %arg1: i32) -> (i32, i32, i32) {
    %c0_i32 = arith.constant 0 : i32
    %c0_i32_0 = arith.constant 0 : i32
    return %arg0, %c0_i32, %arg1 : i32, i32, i32
  }
  func.func @transform_10(%arg0: i32, %arg1: i32) -> (i32, i32, i32) {
    %c0_i32 = arith.constant 0 : i32
    %c0_i32_0 = arith.constant 0 : i32
    %c0_i32_1 = arith.constant 0 : i32
    return %arg0, %c0_i32, %c0_i32_0 : i32, i32, i32
  }
}

</mosaic_0001>

<llo_original>
// kernel: tpu_custom_call.1
$region0: #{tpu_custom_call.1}
  #allocation0 [shape = 'u32[]', space=smem, size = 0x4, offset = 0x4, fixed_abs, tag = 'smem constant byte address 0x4 - core index']
  #allocation1 [shape = 'u32[144,128]{1,0:T(1,128)}', space=vmem, size = 0x12000, scoped, tag = 'internal scratch']
  #allocation2 [shape = 'f32[16,1]{1,0:T(8,128)}', space=vmem, size = 0x2000, scoped, tag = 'scratch operand']
  #allocation3 [shape = 'f32[16,1]{1,0:T(8,128)}', space=vmem, size = 0x2000, scoped, tag = 'scratch operand']
  %s0 = inlined_call_operand.hbm [shape: bf16[2,256,768], index: 0, kind: input, shape index: {}]
  %s1 = inlined_call_operand.hbm [shape: bf16[768,256], index: 1, kind: input, shape index: {}]
  %s2 = inlined_call_operand.vmem [shape: f32[1,256], index: 2, kind: input, shape index: {}]
  %s3 = inlined_call_operand.vmem [shape: bf16[256,64], index: 3, kind: input, shape index: {}]
  %s4 = inlined_call_operand.vmem [shape: f32[1,64], index: 4, kind: input, shape index: {}]
  %s5 = inlined_call_operand.vmem [shape: bf16[64,16], index: 5, kind: input, shape index: {}]
  %s6 = inlined_call_operand.vmem [shape: f32[16,1], index: 6, kind: input, shape index: {}]
  %s7 = inlined_call_operand.vmem [shape: bf16[64,16], index: 7, kind: input, shape index: {}]
  %s8 = inlined_call_operand.vmem [shape: f32[16,1], index: 8, kind: input, shape index: {}]
  %s9 = inlined_call_operand.hbm [shape: f32[2,16,256], index: 9, kind: output, shape index: {0}]
  %s10 = inlined_call_operand.vmem [shape: f32[2,16,1], index: 10, kind: output, shape index: {1}]
  %11 = xla_tuple %s9, %s10
  %s12 = sld [smem:[#allocation0]]
  $region93: #{tpu_custom_call.1} parent=0
    _
  %s14 = ssub.s32 1, %s12
  %s15 = scalar_select 0, %s14, %s12
  $region1: #{tpu_custom_call.1} parent=0
    #allocation4 [shape = 'u8[393216]{0}', space=vmem, size = 0x60000, scoped, tag = 'input window, operand 0']
    #allocation5 [shape = 's32[2]{0}', space=sflag, size = 0x8, scoped, tag = 'scoped memory for tpu_custom_call.1']
    #allocation6 [shape = 's32[2]{0}', space=sflag, size = 0x8, scoped, tag = 'scoped memory for tpu_custom_call.1']
    #allocation7 [shape = 'u8[393216]{0}', space=vmem, size = 0x60000, scoped, tag = 'input window, operand 1, single buffered']
    #allocation8 [shape = 's32[1]{0}', space=sflag, size = 0x4, scoped, tag = 'scoped memory for tpu_custom_call.1']
    #allocation9 [shape = 'u8[16384]{0}', space=vmem, size = 0x4000, scoped, tag = 'output window, operand 0']
    %16 = vsyncpa [#allocation5], 0
    %s17 = scalar_lea.sflag [#allocation5], 1
    %18 = vsyncpa %s17, 0
    %19 = vsyncpa [#allocation8], 0
    %20 = vsyncpa [#allocation6], 0
    %s21 = scalar_lea.sflag [#allocation6], 1
    %22 = vsyncpa %s21, 0
    loop: start=0, step=1, limit=6
    $region2: #{tpu_custom_call.1} parent=1 // loop_pre_header
      _
    $region3: #{tpu_custom_call.1} parent=1 // loop_header
      %s24 = sphi 0, %s28
      %p25 = scmp.ge.s32.totalorder %s24, 6
      %s31 = sphi 0, %s43
      %s32 = sphi 0, %s39
      %s33 = sphi 0, %s31
      %s34 = sphi 0, %s32
      %s35 = sphi 0, %s33
      %s36 = sphi 0, %s34
      %s48 = sphi 0, %s50
      %s51 = sphi 0, %s48
      %s52 = sphi 0, %s51
      %s68 = sphi 0, %s52
      %s72 = sphi 0, %s72
      %s74 = sphi 0, %s72
      %s75 = sphi 0, %s74
      %s89 = sphi 0, %s75
      %s93 = sphi 0, %s93
      %s95 = sphi 0, %s93
      %s96 = sphi 0, %s95
      %s110 = sphi 0, %s96
      %s114 = sphi 0, %s114
      %s116 = sphi 0, %s114
      %s117 = sphi 0, %s116
      %s131 = sphi 0, %s117
      %s135 = sphi 0, %s135
      %s137 = sphi 0, %s135
      %s138 = sphi 0, %s137
      %s152 = sphi 0, %s138
      %s156 = sphi 0, %s156
      %s158 = sphi 0, %s156
      %s159 = sphi 0, %s158
      %s173 = sphi 0, %s159
      %s177 = sphi 0, %s177
      %s179 = sphi 0, %s177
      %s180 = sphi 0, %s179
      %s194 = sphi 0, %s180
      %s198 = sphi 0, %s198
      %s200 = sphi 0, %s198
      %s201 = sphi 0, %s200
      %s215 = sphi 0, %s201
      %s219 = sphi 0, %s219
      %s221 = sphi 0, %s219
      %s222 = sphi 0, %s221
      %s236 = sphi 0, %s222
      %s244 = sphi 0, %s246
      %s247 = sphi 0, %s244
      %s248 = sphi 0, %s247
      %s264 = sphi 0, %s248
      %s270 = sphi 0, %s272
      %s273 = sphi 0, %s270
      %s274 = sphi 0, %s273
      %s290 = sphi 0, %s274
    $region4: #{tpu_custom_call.1} parent=1 // loop_header_branch
      %27 = sbr.rel (%p25) target = $region8
    $region5: #{tpu_custom_call.1} parent=1 // loop_body
      %s29 = ssub.s32 %s24, 1
      %s30 = ssub.s32 %s24, 2
      %s37 = sadd.s32 1, %s32
      %p38 = scmp.ge.s32.totalorder %s37, 2
      %s39 = scalar_select %p38, 0, %s37
      %s40 = sadd.s32 1, %s31
      %s41 = scalar_select %p38, %s40, %s31
      %p42 = scmp.ge.s32.totalorder %s41, 2
      %s43 = scalar_select %p42, 0, %s41
      %s44 = ssub.s32 %s31, %s43
      %s45 = ssub.s32 %s32, %s39
      %s46 = sor.u32 %s44, %s45
      %p47 = scmp.eq.s32.totalorder %s46, 0
      %s49 = sadd.s32 %s48, 1
      %s50 = scalar_select %p47, %s48, %s49
      %p53 = pneg %p47
      %p54 = scmp.eq.s32.totalorder %s24, 3
      %p55 = por %p53, %p54
      %p56 = scmp.ne.s32.totalorder %s48, %s51
      %p57 = scmp.eq.s32.totalorder %s24, 0
      %p58 = por %p56, %p57
      %p59 = scmp.ne.s32.totalorder %s48, %s51
      %p60 = scmp.eq.s32.totalorder %s29, 3
      %p61 = por %p59, %p60
      %p62 = scmp.ne.s32.totalorder %s51, %s52
      %p63 = scmp.eq.s32.totalorder %s29, 0
      %p64 = por %p62, %p63
      %p65 = scmp.ne.s32.totalorder %s51, %s52
      %p66 = scmp.eq.s32.totalorder %s30, 3
      %p67 = por %p65, %p66
      %p69 = scmp.ne.s32.totalorder %s52, %s68
      %p70 = scmp.eq.s32.totalorder %s30, 0
      %p71 = por %p69, %p70
      %s73 = sadd.s32 %s72, 1
      %p76 = scmp.eq.s32.totalorder %s24, 3
      %p77 = scmp.ne.s32.totalorder %s72, %s74
      %p78 = scmp.eq.s32.totalorder %s24, 0
      %p79 = por %p77, %p78
      %p80 = scmp.ne.s32.totalorder %s72, %s74
      %p81 = scmp.eq.s32.totalorder %s29, 3
      %p82 = por %p80, %p81
      %p83 = scmp.ne.s32.totalorder %s74, %s75
      %p84 = scmp.eq.s32.totalorder %s29, 0
      %p85 = por %p83, %p84
      %p86 = scmp.ne.s32.totalorder %s74, %s75
      %p87 = scmp.eq.s32.totalorder %s30, 3
      %p88 = por %p86, %p87
      %p90 = scmp.ne.s32.totalorder %s75, %s89
      %p91 = scmp.eq.s32.totalorder %s30, 0
      %p92 = por %p90, %p91
      %s94 = sadd.s32 %s93, 1
      %p97 = scmp.eq.s32.totalorder %s24, 3
      %p98 = scmp.ne.s32.totalorder %s93, %s95
      %p99 = scmp.eq.s32.totalorder %s24, 0
      %p100 = por %p98, %p99
      %p101 = scmp.ne.s32.totalorder %s93, %s95
      %p102 = scmp.eq.s32.totalorder %s29, 3
      %p103 = por %p101, %p102
      %p104 = scmp.ne.s32.totalorder %s95, %s96
      %p105 = scmp.eq.s32.totalorder %s29, 0
      %p106 = por %p104, %p105
      %p107 = scmp.ne.s32.totalorder %s95, %s96
      %p108 = scmp.eq.s32.totalorder %s30, 3
      %p109 = por %p107, %p108
      %p111 = scmp.ne.s32.totalorder %s96, %s110
      %p112 = scmp.eq.s32.totalorder %s30, 0
      %p113 = por %p111, %p112
      %s115 = sadd.s32 %s114, 1
      %p118 = scmp.eq.s32.totalorder %s24, 3
      %p119 = scmp.ne.s32.totalorder %s114, %s116
      %p120 = scmp.eq.s32.totalorder %s24, 0
      %p121 = por %p119, %p120
      %p122 = scmp.ne.s32.totalorder %s114, %s116
      %p123 = scmp.eq.s32.totalorder %s29, 3
      %p124 = por %p122, %p123
      %p125 = scmp.ne.s32.totalorder %s116, %s117
      %p126 = scmp.eq.s32.totalorder %s29, 0
      %p127 = por %p125, %p126
      %p128 = scmp.ne.s32.totalorder %s116, %s117
      %p129 = scmp.eq.s32.totalorder %s30, 3
      %p130 = por %p128, %p129
      %p132 = scmp.ne.s32.totalorder %s117, %s131
      %p133 = scmp.eq.s32.totalorder %s30, 0
      %p134 = por %p132, %p133
      %s136 = sadd.s32 %s135, 1
      %p139 = scmp.eq.s32.totalorder %s24, 3
      %p140 = scmp.ne.s32.totalorder %s135, %s137
      %p141 = scmp.eq.s32.totalorder %s24, 0
      %p142 = por %p140, %p141
      %p143 = scmp.ne.s32.totalorder %s135, %s137
      %p144 = scmp.eq.s32.totalorder %s29, 3
      %p145 = por %p143, %p144
      %p146 = scmp.ne.s32.totalorder %s137, %s138
      %p147 = scmp.eq.s32.totalorder %s29, 0
      %p148 = por %p146, %p147
      %p149 = scmp.ne.s32.totalorder %s137, %s138
      %p150 = scmp.eq.s32.totalorder %s30, 3
      %p151 = por %p149, %p150
      %p153 = scmp.ne.s32.totalorder %s138, %s152
      %p154 = scmp.eq.s32.totalorder %s30, 0
      %p155 = por %p153, %p154
      %s157 = sadd.s32 %s156, 1
      %p160 = scmp.eq.s32.totalorder %s24, 3
      %p161 = scmp.ne.s32.totalorder %s156, %s158
      %p162 = scmp.eq.s32.totalorder %s24, 0
      %p163 = por %p161, %p162
      %p164 = scmp.ne.s32.totalorder %s156, %s158
      %p165 = scmp.eq.s32.totalorder %s29, 3
      %p166 = por %p164, %p165
      %p167 = scmp.ne.s32.totalorder %s158, %s159
      %p168 = scmp.eq.s32.totalorder %s29, 0
      %p169 = por %p167, %p168
      %p170 = scmp.ne.s32.totalorder %s158, %s159
      %p171 = scmp.eq.s32.totalorder %s30, 3
      %p172 = por %p170, %p171
      %p174 = scmp.ne.s32.totalorder %s159, %s173
      %p175 = scmp.eq.s32.totalorder %s30, 0
      %p176 = por %p174, %p175
      %s178 = sadd.s32 %s177, 1
      %p181 = scmp.eq.s32.totalorder %s24, 3
      %p182 = scmp.ne.s32.totalorder %s177, %s179
      %p183 = scmp.eq.s32.totalorder %s24, 0
      %p184 = por %p182, %p183
      %p185 = scmp.ne.s32.totalorder %s177, %s179
      %p186 = scmp.eq.s32.totalorder %s29, 3
      %p187 = por %p185, %p186
      %p188 = scmp.ne.s32.totalorder %s179, %s180
      %p189 = scmp.eq.s32.totalorder %s29, 0
      %p190 = por %p188, %p189
      %p191 = scmp.ne.s32.totalorder %s179, %s180
      %p192 = scmp.eq.s32.totalorder %s30, 3
      %p193 = por %p191, %p192
      %p195 = scmp.ne.s32.totalorder %s180, %s194
      %p196 = scmp.eq.s32.totalorder %s30, 0
      %p197 = por %p195, %p196
      %s199 = sadd.s32 %s198, 1
      %p202 = scmp.eq.s32.totalorder %s24, 3
      %p203 = scmp.ne.s32.totalorder %s198, %s200
      %p204 = scmp.eq.s32.totalorder %s24, 0
      %p205 = por %p203, %p204
      %p206 = scmp.ne.s32.totalorder %s198, %s200
      %p207 = scmp.eq.s32.totalorder %s29, 3
      %p208 = por %p206, %p207
      %p209 = scmp.ne.s32.totalorder %s200, %s201
      %p210 = scmp.eq.s32.totalorder %s29, 0
      %p211 = por %p209, %p210
      %p212 = scmp.ne.s32.totalorder %s200, %s201
      %p213 = scmp.eq.s32.totalorder %s30, 3
      %p214 = por %p212, %p213
      %p216 = scmp.ne.s32.totalorder %s201, %s215
      %p217 = scmp.eq.s32.totalorder %s30, 0
      %p218 = por %p216, %p217
      %s220 = sadd.s32 %s219, 1
      %p223 = scmp.eq.s32.totalorder %s24, 3
      %p224 = scmp.ne.s32.totalorder %s219, %s221
      %p225 = scmp.eq.s32.totalorder %s24, 0
      %p226 = por %p224, %p225
      %p227 = scmp.ne.s32.totalorder %s219, %s221
      %p228 = scmp.eq.s32.totalorder %s29, 3
      %p229 = por %p227, %p228
      %p230 = scmp.ne.s32.totalorder %s221, %s222
      %p231 = scmp.eq.s32.totalorder %s29, 0
      %p232 = por %p230, %p231
      %p233 = scmp.ne.s32.totalorder %s221, %s222
      %p234 = scmp.eq.s32.totalorder %s30, 3
      %p235 = por %p233, %p234
      %p237 = scmp.ne.s32.totalorder %s222, %s236
      %p238 = scmp.eq.s32.totalorder %s30, 0
      %p239 = por %p237, %p238
      %s240 = ssub.s32 %s31, %s43
      %s241 = ssub.s32 %s32, %s39
      %s242 = sor.u32 %s240, %s241
      %p243 = scmp.eq.s32.totalorder %s242, 0
      %s245 = sadd.s32 %s244, 1
      %s246 = scalar_select %p243, %s244, %s245
      %p249 = pneg %p243
      %p250 = scmp.eq.s32.totalorder %s24, 3
      %p251 = por %p249, %p250
      %p252 = scmp.ne.s32.totalorder %s244, %s247
      %p253 = scmp.eq.s32.totalorder %s24, 0
      %p254 = por %p252, %p253
      %p255 = scmp.ne.s32.totalorder %s244, %s247
      %p256 = scmp.eq.s32.totalorder %s29, 3
      %p257 = por %p255, %p256
      %p258 = scmp.ne.s32.totalorder %s247, %s248
      %p259 = scmp.eq.s32.totalorder %s29, 0
      %p260 = por %p258, %p259
      %p261 = scmp.ne.s32.totalorder %s247, %s248
      %p262 = scmp.eq.s32.totalorder %s30, 3
      %p263 = por %p261, %p262
      %p265 = scmp.ne.s32.totalorder %s248, %s264
      %p266 = scmp.eq.s32.totalorder %s30, 0
      %p267 = por %p265, %p266
      %s268 = ssub.s32 %s31, %s43
      %p269 = scmp.eq.s32.totalorder %s268, 0
      %s271 = sadd.s32 %s270, 1
      %s272 = scalar_select %p269, %s270, %s271
      %p275 = pneg %p269
      %p276 = scmp.eq.s32.totalorder %s24, 3
      %p277 = por %p275, %p276
      %p278 = scmp.ne.s32.totalorder %s270, %s273
      %p279 = scmp.eq.s32.totalorder %s24, 0
      %p280 = por %p278, %p279
      %p281 = scmp.ne.s32.totalorder %s270, %s273
      %p282 = scmp.eq.s32.totalorder %s29, 3
      %p283 = por %p281, %p282
      %p284 = scmp.ne.s32.totalorder %s273, %s274
      %p285 = scmp.eq.s32.totalorder %s29, 0
      %p286 = por %p284, %p285
      %p287 = scmp.ne.s32.totalorder %s273, %s274
      %p288 = scmp.eq.s32.totalorder %s30, 3
      %p289 = por %p287, %p288
      %p291 = scmp.ne.s32.totalorder %s274, %s290
      %p292 = scmp.eq.s32.totalorder %s30, 0
      %p293 = por %p291, %p292
      %p294 = scmp.le.s32.totalorder 1, %s24
      %p295 = scmp.lt.s32.totalorder %s24, 5
      %p296 = pnand %p294, %p295
      %p297 = pneg %p296
      // Predicated region
      $region9: #{tpu_custom_call.1} parent=5 // pred_check
        _
      $region10: #{tpu_custom_call.1} parent=5 // pred_check_branch
        %299 = sbr.rel (%p296) target = $region12
      $region11: #{tpu_custom_call.1} parent=5 // pred_region
        %s300 = ssub.s32 %s24, 1
        // Predicated region
        $region13: #{tpu_custom_call.1} parent=11 // pred_check
          %p301 = pneg %p85
        $region14: #{tpu_custom_call.1} parent=11 // pred_check_branch
          %303 = sbr.rel (%p301) target = $region16
        $region15: #{tpu_custom_call.1} parent=11 // pred_region
          %s305 = ssub.s32 12288, 12288
          %306 = vsyncadd [#allocation8], %s305
          %s307 = sshll.u32 [#allocation7], 4
          %s308 = int_to_ptr.vmem [resolvable:$true] %s307
          %313 = dma.hbm_to_vmem [thread:$0]  %s1, 12288, %s308, [#allocation8], 128, 128, 8
        $region16: #{tpu_custom_call.1} parent=11 // pred_fallthru
          _
        // Predicated region
        $region17: #{tpu_custom_call.1} parent=11 // pred_check
          %p314 = pneg %p106
        $region18: #{tpu_custom_call.1} parent=11 // pred_check_branch
          %316 = sbr.rel (%p314) target = $region20
        $region19: #{tpu_custom_call.1} parent=11 // pred_region
          _
        $region20: #{tpu_custom_call.1} parent=11 // pred_fallthru
          _
        // Predicated region
        $region21: #{tpu_custom_call.1} parent=11 // pred_check
          %p317 = pneg %p127
        $region22: #{tpu_custom_call.1} parent=11 // pred_check_branch
          %319 = sbr.rel (%p317) target = $region24
        $region23: #{tpu_custom_call.1} parent=11 // pred_region
          _
        $region24: #{tpu_custom_call.1} parent=11 // pred_fallthru
          _
        // Predicated region
        $region25: #{tpu_custom_call.1} parent=11 // pred_check
          %p320 = pneg %p148
        $region26: #{tpu_custom_call.1} parent=11 // pred_check_branch
          %322 = sbr.rel (%p320) target = $region28
        $region27: #{tpu_custom_call.1} parent=11 // pred_region
          _
        $region28: #{tpu_custom_call.1} parent=11 // pred_fallthru
          _
        // Predicated region
        $region29: #{tpu_custom_call.1} parent=11 // pred_check
          %p323 = pneg %p169
        $region30: #{tpu_custom_call.1} parent=11 // pred_check_branch
          %325 = sbr.rel (%p323) target = $region32
        $region31: #{tpu_custom_call.1} parent=11 // pred_region
          _
        $region32: #{tpu_custom_call.1} parent=11 // pred_fallthru
          _
        // Predicated region
        $region33: #{tpu_custom_call.1} parent=11 // pred_check
          %p326 = pneg %p190
        $region34: #{tpu_custom_call.1} parent=11 // pred_check_branch
          %328 = sbr.rel (%p326) target = $region36
        $region35: #{tpu_custom_call.1} parent=11 // pred_region
          _
        $region36: #{tpu_custom_call.1} parent=11 // pred_fallthru
          _
        // Predicated region
        $region37: #{tpu_custom_call.1} parent=11 // pred_check
          %p329 = pneg %p211
        $region38: #{tpu_custom_call.1} parent=11 // pred_check_branch
          %331 = sbr.rel (%p329) target = $region40
        $region39: #{tpu_custom_call.1} parent=11 // pred_region
          _
        $region40: #{tpu_custom_call.1} parent=11 // pred_fallthru
          _
        // Predicated region
        $region41: #{tpu_custom_call.1} parent=11 // pred_check
          %p332 = pneg %p232
        $region42: #{tpu_custom_call.1} parent=11 // pred_check_branch
          %334 = sbr.rel (%p332) target = $region44
        $region43: #{tpu_custom_call.1} parent=11 // pred_region
          _
        $region44: #{tpu_custom_call.1} parent=11 // pred_fallthru
          _
      $region12: #{tpu_custom_call.1} parent=5 // pred_fallthru
        _
      %p335 = scmp.lt.s32.totalorder %s24, 4
      // Predicated region
      $region45: #{tpu_custom_call.1} parent=5 // pred_check
        %p336 = pneg %p335
      $region46: #{tpu_custom_call.1} parent=5 // pred_check_branch
        %338 = sbr.rel (%p336) target = $region48
      $region47: #{tpu_custom_call.1} parent=5 // pred_region
        // Predicated region
        $region49: #{tpu_custom_call.1} parent=47 // pred_check
          %p339 = pneg %p58
        $region50: #{tpu_custom_call.1} parent=47 // pred_check_branch
          %341 = sbr.rel (%p339) target = $region52
        $region51: #{tpu_custom_call.1} parent=47 // pred_region
          %s342 = sand.u32 %s48, 1
          %s343 = scalar_lea.sflag [#allocation5], %s342
          %s344 = sand.u32 %s48, 1
          %s345 = smul.addr %s344, 384
          %s346 = scalar_lea.vmem [#allocation4], %s345
          %s347 = smul.u32 16, %s32
          %s349 = ssub.s32 6144, 6144
          %350 = vsyncadd %s343, %s349
          %s351 = smul.addr %s347, 6
          %s352 = smul.addr %s31, 192
          %s353 = sadd.s32 %s351, %s352
          %s354 = smul.addr %s353, 64
          %s355 = scalar_lea.hbm %s0, %s354
          %s356 = sshll.u32 %s346, 4
          %s357 = int_to_ptr.vmem [resolvable:$true] %s356
          %362 = dma.hbm_to_vmem [thread:$0]  %s355, 6144, %s357, %s343, 384, 384, 24
        $region52: #{tpu_custom_call.1} parent=47 // pred_fallthru
          _
      $region48: #{tpu_custom_call.1} parent=5 // pred_fallthru
        _
      %p363 = scmp.le.s32.totalorder 1, %s24
      %p364 = scmp.lt.s32.totalorder %s24, 5
      %p365 = pnand %p363, %p364
      %p366 = pneg %p365
      // Predicated region
      $region53: #{tpu_custom_call.1} parent=5 // pred_check
        _
      $region54: #{tpu_custom_call.1} parent=5 // pred_check_branch
        %368 = sbr.rel (%p365) target = $region56
      $region55: #{tpu_custom_call.1} parent=5 // pred_region
        %s369 = ssub.s32 %s24, 1
        %s370 = sand.u32 %s51, 1
        %s371 = scalar_lea.sflag [#allocation5], %s370
        %s372 = sand.u32 %s51, 1
        %s373 = smul.addr %s372, 384
        %s374 = scalar_lea.vmem [#allocation4], %s373
        // Predicated region
        $region57: #{tpu_custom_call.1} parent=55 // pred_check
          %p375 = pneg %p64
        $region58: #{tpu_custom_call.1} parent=55 // pred_check_branch
          %377 = sbr.rel (%p375) target = $region60
        $region59: #{tpu_custom_call.1} parent=55 // pred_region
          %378 = dma.done %s371, 6144
        $region60: #{tpu_custom_call.1} parent=55 // pred_fallthru
          _
        // Predicated region
        $region61: #{tpu_custom_call.1} parent=55 // pred_check
          %p379 = pneg %p85
        $region62: #{tpu_custom_call.1} parent=55 // pred_check_branch
          %381 = sbr.rel (%p379) target = $region64
        $region63: #{tpu_custom_call.1} parent=55 // pred_region
          %382 = dma.done [#allocation8], 12288
        $region64: #{tpu_custom_call.1} parent=55 // pred_fallthru
          _
        %s383 = sand.u32 %s51, 1
        %s384 = scalar_lea.sflag [#allocation5], %s383
        %s385 = sand.u32 %s51, 1
        %s386 = smul.addr %s385, 384
        %s387 = scalar_lea.vmem [#allocation4], %s386
        %p388 = pneg %p64
        %p389 = pneg %p61
        %p390 = pneg %p85
        %p391 = pneg %p82
        %p392 = pneg %p106
        %p393 = pneg %p103
        %p394 = pneg %p127
        %p395 = pneg %p124
        %p396 = pneg %p148
        %p397 = pneg %p145
        %p398 = pneg %p169
        %p399 = pneg %p166
        %p400 = pneg %p190
        %p401 = pneg %p187
        %p402 = pneg %p211
        %p403 = pneg %p208
        %p404 = pneg %p232
        %p405 = pneg %p229
        %p406 = pneg %p260
        %p407 = pneg %p257
        %s408 = sand.u32 %s247, 1
        %s409 = scalar_lea.sflag [#allocation6], %s408
        %s410 = sand.u32 %s247, 1
        %s411 = smul.addr %s410, 16
        %s412 = scalar_lea.vmem [#allocation9], %s411
        %p413 = pneg %p286
        %p414 = pneg %p283
        %p415 = scmp.lt.s32.totalorder %s33, 1
        %s416 = scalar_select %p415, %s33, 1
        %s417 = smul.addr %s416, 2
        %s418 = smul.addr %s417, 8
        %s419 = scalar_lea.vmem %s10, %s418
        %s420 = smul.u32 16, %s34
        %p421 = scmp.lt.s32.totalorder %s33, 1
        %s422 = scalar_select %p421, %s33, 1
        %s423 = smul.addr %s422, 2
        %s424 = smul.addr %s423, 8
        %s425 = scalar_lea.vmem %s10, %s424
        %p427 = scmp.eq.s32.totalorder %s34, 0
        // Predicated region
        $region65: #{tpu_custom_call.1} parent=55 // pred_check
          %p428 = pneg %p427
        $region66: #{tpu_custom_call.1} parent=55 // pred_check_branch
          %430 = sbr.rel (%p428) target = $region68
        $region67: #{tpu_custom_call.1} parent=55 // pred_region
          %vm431 = vcmask 7168
          %432 = vst.msk [vmem:[#allocation2] sm:$0xff] %vm431, 0.0
          %433 = vst.msk [vmem:[#allocation2 + $0x8] sm:$0xff] %vm431, 0.0
          %434 = vst.msk [vmem:[#allocation3] sm:$0xff] %vm431, 0.0
          %435 = vst.msk [vmem:[#allocation3 + $0x8] sm:$0xff] %vm431, 0.0
        $region68: #{tpu_custom_call.1} parent=55 // pred_fallthru
          _
        %v436 = vld [vmem:[%s374] sm:$0xff]
        %v437 = vld [vmem:[%s374 + $0x8] sm:$0xff]
        %v438 = vld [vmem:[%s374 + $0x10] sm:$0xff]
        %v439 = vld [vmem:[%s374 + $0x18] sm:$0xff]
        %v440 = vld [vmem:[%s374 + $0x20] sm:$0xff]
        %v441 = vld [vmem:[%s374 + $0x28] sm:$0xff]
        %v442 = vld [vmem:[%s374 + $0x30] sm:$0xff]
        %v443 = vld [vmem:[%s374 + $0x38] sm:$0xff]
        %v444 = vld [vmem:[%s374 + $0x40] sm:$0xff]
        %v445 = vld [vmem:[%s374 + $0x48] sm:$0xff]
        %v446 = vld [vmem:[%s374 + $0x50] sm:$0xff]
        %v447 = vld [vmem:[%s374 + $0x58] sm:$0xff]
        %v448 = vld [vmem:[%s374 + $0x60] sm:$0xff]
        %v449 = vld [vmem:[%s374 + $0x68] sm:$0xff]
        %v450 = vld [vmem:[%s374 + $0x70] sm:$0xff]
        %v451 = vld [vmem:[%s374 + $0x78] sm:$0xff]
        %v452 = vld [vmem:[%s374 + $0x80] sm:$0xff]
        %v453 = vld [vmem:[%s374 + $0x88] sm:$0xff]
        %v454 = vld [vmem:[%s374 + $0x90] sm:$0xff]
        %v455 = vld [vmem:[%s374 + $0x98] sm:$0xff]
        %v456 = vld [vmem:[%s374 + $0xa0] sm:$0xff]
        %v457 = vld [vmem:[%s374 + $0xa8] sm:$0xff]
        %v458 = vld [vmem:[%s374 + $0xb0] sm:$0xff]
        %v459 = vld [vmem:[%s374 + $0xb8] sm:$0xff]
        %v460 = vld [vmem:[%s374 + $0xc0] sm:$0xff]
        %v461 = vld [vmem:[%s374 + $0xc8] sm:$0xff]
        %v462 = vld [vmem:[%s374 + $0xd0] sm:$0xff]
        %v463 = vld [vmem:[%s374 + $0xd8] sm:$0xff]
        %v464 = vld [vmem:[%s374 + $0xe0] sm:$0xff]
        %v465 = vld [vmem:[%s374 + $0xe8] sm:$0xff]
        %v466 = vld [vmem:[%s374 + $0xf0] sm:$0xff]
        %v467 = vld [vmem:[%s374 + $0xf8] sm:$0xff]
        %v468 = vld [vmem:[%s374 + $0x100] sm:$0xff]
        %v469 = vld [vmem:[%s374 + $0x108] sm:$0xff]
        %v470 = vld [vmem:[%s374 + $0x110] sm:$0xff]
        %v471 = vld [vmem:[%s374 + $0x118] sm:$0xff]
        %v472 = vld [vmem:[%s374 + $0x120] sm:$0xff]
        %v473 = vld [vmem:[%s374 + $0x128] sm:$0xff]
        %v474 = vld [vmem:[%s374 + $0x130] sm:$0xff]
        %v475 = vld [vmem:[%s374 + $0x138] sm:$0xff]
        %v476 = vld [vmem:[%s374 + $0x140] sm:$0xff]
        %v477 = vld [vmem:[%s374 + $0x148] sm:$0xff]
        %v478 = vld [vmem:[%s374 + $0x150] sm:$0xff]
        %v479 = vld [vmem:[%s374 + $0x158] sm:$0xff]
        %v480 = vld [vmem:[%s374 + $0x160] sm:$0xff]
        %v481 = vld [vmem:[%s374 + $0x168] sm:$0xff]
        %v482 = vld [vmem:[%s374 + $0x170] sm:$0xff]
        %v483 = vld [vmem:[%s374 + $0x178] sm:$0xff]
        %v484 = vmax.bf16 %v436, 0
        %v485 = vmax.bf16 %v437, 0
        %v486 = vmax.bf16 %v438, 0
        %v487 = vmax.bf16 %v439, 0
        %v488 = vmax.bf16 %v440, 0
        %v489 = vmax.bf16 %v441, 0
        %v490 = vmax.bf16 %v442, 0
        %v491 = vmax.bf16 %v443, 0
        %v492 = vmax.bf16 %v444, 0
        %v493 = vmax.bf16 %v445, 0
        %v494 = vmax.bf16 %v446, 0
        %v495 = vmax.bf16 %v447, 0
        %v496 = vmax.bf16 %v448, 0
        %v497 = vmax.bf16 %v449, 0
        %v498 = vmax.bf16 %v450, 0
        %v499 = vmax.bf16 %v451, 0
        %v500 = vmax.bf16 %v452, 0
        %v501 = vmax.bf16 %v453, 0
        %v502 = vmax.bf16 %v454, 0
        %v503 = vmax.bf16 %v455, 0
        %v504 = vmax.bf16 %v456, 0
        %v505 = vmax.bf16 %v457, 0
        %v506 = vmax.bf16 %v458, 0
        %v507 = vmax.bf16 %v459, 0
        %v508 = vmax.bf16 %v460, 0
        %v509 = vmax.bf16 %v461, 0
        %v510 = vmax.bf16 %v462, 0
        %v511 = vmax.bf16 %v463, 0
        %v512 = vmax.bf16 %v464, 0
        %v513 = vmax.bf16 %v465, 0
        %v514 = vmax.bf16 %v466, 0
        %v515 = vmax.bf16 %v467, 0
        %v516 = vmax.bf16 %v468, 0
        %v517 = vmax.bf16 %v469, 0
        %v518 = vmax.bf16 %v470, 0
        %v519 = vmax.bf16 %v471, 0
        %v520 = vmax.bf16 %v472, 0
        %v521 = vmax.bf16 %v473, 0
        %v522 = vmax.bf16 %v474, 0
        %v523 = vmax.bf16 %v475, 0
        %v524 = vmax.bf16 %v476, 0
        %v525 = vmax.bf16 %v477, 0
        %v526 = vmax.bf16 %v478, 0
        %v527 = vmax.bf16 %v479, 0
        %v528 = vmax.bf16 %v480, 0
        %v529 = vmax.bf16 %v481, 0
        %v530 = vmax.bf16 %v482, 0
        %v531 = vmax.bf16 %v483, 0
        %v532 = vld [vmem:[#allocation7] sm:$0xff]
        %v533 = vld [vmem:[#allocation7 + $0x8] sm:$0xff]
        %v534 = vld [vmem:[#allocation7 + $0x10] sm:$0xff]
        %v535 = vld [vmem:[#allocation7 + $0x18] sm:$0xff]
        %v536 = vld [vmem:[#allocation7 + $0x20] sm:$0xff]
        %v537 = vld [vmem:[#allocation7 + $0x28] sm:$0xff]
        %v538 = vld [vmem:[#allocation7 + $0x30] sm:$0xff]
        %v539 = vld [vmem:[#allocation7 + $0x38] sm:$0xff]
        %v540 = vld [vmem:[#allocation7 + $0x40] sm:$0xff]
        %v541 = vld [vmem:[#allocation7 + $0x48] sm:$0xff]
        %v542 = vld [vmem:[#allocation7 + $0x50] sm:$0xff]
        %v543 = vld [vmem:[#allocation7 + $0x58] sm:$0xff]
        %v544 = vld [vmem:[#allocation7 + $0x60] sm:$0xff]
        %v545 = vld [vmem:[#allocation7 + $0x68] sm:$0xff]
        %v546 = vld [vmem:[#allocation7 + $0x70] sm:$0xff]
        %v547 = vld [vmem:[#allocation7 + $0x78] sm:$0xff]
        %v548 = vld [vmem:[#allocation7 + $0x80] sm:$0xff]
        %v549 = vld [vmem:[#allocation7 + $0x88] sm:$0xff]
        %v550 = vld [vmem:[#allocation7 + $0x90] sm:$0xff]
        %v551 = vld [vmem:[#allocation7 + $0x98] sm:$0xff]
        %v552 = vld [vmem:[#allocation7 + $0xa0] sm:$0xff]
        %v553 = vld [vmem:[#allocation7 + $0xa8] sm:$0xff]
        %v554 = vld [vmem:[#allocation7 + $0xb0] sm:$0xff]
        %v555 = vld [vmem:[#allocation7 + $0xb8] sm:$0xff]
        %v556 = vld [vmem:[#allocation7 + $0xc0] sm:$0xff]
        %v557 = vld [vmem:[#allocation7 + $0xc8] sm:$0xff]
        %v558 = vld [vmem:[#allocation7 + $0xd0] sm:$0xff]
        %v559 = vld [vmem:[#allocation7 + $0xd8] sm:$0xff]
        %v560 = vld [vmem:[#allocation7 + $0xe0] sm:$0xff]
        %v561 = vld [vmem:[#allocation7 + $0xe8] sm:$0xff]
        %v562 = vld [vmem:[#allocation7 + $0xf0] sm:$0xff]
        %v563 = vld [vmem:[#allocation7 + $0xf8] sm:$0xff]
        %v564 = vld [vmem:[#allocation7 + $0x100] sm:$0xff]
        %v565 = vld [vmem:[#allocation7 + $0x108] sm:$0xff]
        %v566 = vld [vmem:[#allocation7 + $0x110] sm:$0xff]
        %v567 = vld [vmem:[#allocation7 + $0x118] sm:$0xff]
        %v568 = vld [vmem:[#allocation7 + $0x120] sm:$0xff]
        %v569 = vld [vmem:[#allocation7 + $0x128] sm:$0xff]
        %v570 = vld [vmem:[#allocation7 + $0x130] sm:$0xff]
        %v571 = vld [vmem:[#allocation7 + $0x138] sm:$0xff]
        %v572 = vld [vmem:[#allocation7 + $0x140] sm:$0xff]
        %v573 = vld [vmem:[#allocation7 + $0x148] sm:$0xff]
        %v574 = vld [vmem:[#allocation7 + $0x150] sm:$0xff]
        %v575 = vld [vmem:[#allocation7 + $0x158] sm:$0xff]
        %v576 = vld [vmem:[#allocation7 + $0x160] sm:$0xff]
        %v577 = vld [vmem:[#allocation7 + $0x168] sm:$0xff]
        %v578 = vld [vmem:[#allocation7 + $0x170] sm:$0xff]
        %v579 = vld [vmem:[#allocation7 + $0x178] sm:$0xff]
        %v580 = vld [vmem:[#allocation7 + $0x180] sm:$0xff]
        %v581 = vld [vmem:[#allocation7 + $0x188] sm:$0xff]
        %v582 = vld [vmem:[#allocation7 + $0x190] sm:$0xff]
        %v583 = vld [vmem:[#allocation7 + $0x198] sm:$0xff]
        %v584 = vld [vmem:[#allocation7 + $0x1a0] sm:$0xff]
        %v585 = vld [vmem:[#allocation7 + $0x1a8] sm:$0xff]
        %v586 = vld [vmem:[#allocation7 + $0x1b0] sm:$0xff]
        %v587 = vld [vmem:[#allocation7 + $0x1b8] sm:$0xff]
        %v588 = vld [vmem:[#allocation7 + $0x1c0] sm:$0xff]
        %v589 = vld [vmem:[#allocation7 + $0x1c8] sm:$0xff]
        %v590 = vld [vmem:[#allocation7 + $0x1d0] sm:$0xff]
        %v591 = vld [vmem:[#allocation7 + $0x1d8] sm:$0xff]
        %v592 = vld [vmem:[#allocation7 + $0x1e0] sm:$0xff]
        %v593 = vld [vmem:[#allocation7 + $0x1e8] sm:$0xff]
        %v594 = vld [vmem:[#allocation7 + $0x1f0] sm:$0xff]
        %v595 = vld [vmem:[#allocation7 + $0x1f8] sm:$0xff]
        %v596 = vld [vmem:[#allocation7 + $0x200] sm:$0xff]
        %v597 = vld [vmem:[#allocation7 + $0x208] sm:$0xff]
        %v598 = vld [vmem:[#allocation7 + $0x210] sm:$0xff]
        %v599 = vld [vmem:[#allocation7 + $0x218] sm:$0xff]
        %v600 = vld [vmem:[#allocation7 + $0x220] sm:$0xff]
        %v601 = vld [vmem:[#allocation7 + $0x228] sm:$0xff]
        %v602 = vld [vmem:[#allocation7 + $0x230] sm:$0xff]
        %v603 = vld [vmem:[#allocation7 + $0x238] sm:$0xff]
        %v604 = vld [vmem:[#allocation7 + $0x240] sm:$0xff]
        %v605 = vld [vmem:[#allocation7 + $0x248] sm:$0xff]
        %v606 = vld [vmem:[#allocation7 + $0x250] sm:$0xff]
        %v607 = vld [vmem:[#allocation7 + $0x258] sm:$0xff]
        %v608 = vld [vmem:[#allocation7 + $0x260] sm:$0xff]
        %v609 = vld [vmem:[#allocation7 + $0x268] sm:$0xff]
        %v610 = vld [vmem:[#allocation7 + $0x270] sm:$0xff]
        %v611 = vld [vmem:[#allocation7 + $0x278] sm:$0xff]
        %v612 = vld [vmem:[#allocation7 + $0x280] sm:$0xff]
        %v613 = vld [vmem:[#allocation7 + $0x288] sm:$0xff]
        %v614 = vld [vmem:[#allocation7 + $0x290] sm:$0xff]
        %v615 = vld [vmem:[#allocation7 + $0x298] sm:$0xff]
        %v616 = vld [vmem:[#allocation7 + $0x2a0] sm:$0xff]
        %v617 = vld [vmem:[#allocation7 + $0x2a8] sm:$0xff]
        %v618 = vld [vmem:[#allocation7 + $0x2b0] sm:$0xff]
        %v619 = vld [vmem:[#allocation7 + $0x2b8] sm:$0xff]
        %v620 = vld [vmem:[#allocation7 + $0x2c0] sm:$0xff]
        %v621 = vld [vmem:[#allocation7 + $0x2c8] sm:$0xff]
        %v622 = vld [vmem:[#allocation7 + $0x2d0] sm:$0xff]
        %v623 = vld [vmem:[#allocation7 + $0x2d8] sm:$0xff]
        %v624 = vld [vmem:[#allocation7 + $0x2e0] sm:$0xff]
        %v625 = vld [vmem:[#allocation7 + $0x2e8] sm:$0xff]
        %v626 = vld [vmem:[#allocation7 + $0x2f0] sm:$0xff]
        %v627 = vld [vmem:[#allocation7 + $0x2f8] sm:$0xff]
        %v628 = vld [vmem:[%s2] sm:$0x3]
        %v630 = vlaneseq
        %v631 = vshrl.u32 %v630, 7
        %v632 = vsub.s32 0, %v631
        %v633 = vrot.slane %v628, %v632
        %v634 = vlaneseq
        %v635 = vshrl.u32 %v634, 7
        %v636 = vsub.s32 1, %v635
        %v637 = vrot.slane %v628, %v636
        %v688 = vunpack.c.l.b16 %v484
        %v689 = vunpack.c.h.b16 %v484
        %v690 = vunpack.c.l.b16 %v485
        %v691 = vunpack.c.h.b16 %v485
        %v692 = vunpack.c.l.b16 %v486
        %v693 = vunpack.c.h.b16 %v486
        %v694 = vunpack.c.l.b16 %v487
        %v695 = vunpack.c.h.b16 %v487
        %v696 = vunpack.c.l.b16 %v488
        %v697 = vunpack.c.h.b16 %v488
        %v698 = vunpack.c.l.b16 %v489
        %v699 = vunpack.c.h.b16 %v489
        %v700 = vunpack.c.l.b16 %v490
        %v701 = vunpack.c.h.b16 %v490
        %v702 = vunpack.c.l.b16 %v491
        %v703 = vunpack.c.h.b16 %v491
        %v704 = vunpack.c.l.b16 %v492
        %v705 = vunpack.c.h.b16 %v492
        %v706 = vunpack.c.l.b16 %v493
        %v707 = vunpack.c.h.b16 %v493
        %v708 = vunpack.c.l.b16 %v494
        %v709 = vunpack.c.h.b16 %v494
        %v710 = vunpack.c.l.b16 %v495
        %v711 = vunpack.c.h.b16 %v495
        %v712 = vunpack.c.l.b16 %v496
        %v713 = vunpack.c.h.b16 %v496
        %v714 = vunpack.c.l.b16 %v497
        %v715 = vunpack.c.h.b16 %v497
        %v716 = vunpack.c.l.b16 %v498
        %v717 = vunpack.c.h.b16 %v498
        %v718 = vunpack.c.l.b16 %v499
        %v719 = vunpack.c.h.b16 %v499
        %v720 = vunpack.c.l.b16 %v500
        %v721 = vunpack.c.h.b16 %v500
        %v722 = vunpack.c.l.b16 %v501
        %v723 = vunpack.c.h.b16 %v501
        %v724 = vunpack.c.l.b16 %v502
        %v725 = vunpack.c.h.b16 %v502
        %v726 = vunpack.c.l.b16 %v503
        %v727 = vunpack.c.h.b16 %v503
        %v728 = vunpack.c.l.b16 %v504
        %v729 = vunpack.c.h.b16 %v504
        %v730 = vunpack.c.l.b16 %v505
        %v731 = vunpack.c.h.b16 %v505
        %v732 = vunpack.c.l.b16 %v506
        %v733 = vunpack.c.h.b16 %v506
        %v734 = vunpack.c.l.b16 %v507
        %v735 = vunpack.c.h.b16 %v507
        %v736 = vunpack.c.l.b16 %v508
        %v737 = vunpack.c.h.b16 %v508
        %v738 = vunpack.c.l.b16 %v509
        %v739 = vunpack.c.h.b16 %v509
        %v740 = vunpack.c.l.b16 %v510
        %v741 = vunpack.c.h.b16 %v510
        %v742 = vunpack.c.l.b16 %v511
        %v743 = vunpack.c.h.b16 %v511
        %v744 = vunpack.c.l.b16 %v512
        %v745 = vunpack.c.h.b16 %v512
        %v746 = vunpack.c.l.b16 %v513
        %v747 = vunpack.c.h.b16 %v513
        %v748 = vunpack.c.l.b16 %v514
        %v749 = vunpack.c.h.b16 %v514
        %v750 = vunpack.c.l.b16 %v515
        %v751 = vunpack.c.h.b16 %v515
        %v752 = vunpack.c.l.b16 %v516
        %v753 = vunpack.c.h.b16 %v516
        %v754 = vunpack.c.l.b16 %v517
        %v755 = vunpack.c.h.b16 %v517
        %v756 = vunpack.c.l.b16 %v518
        %v757 = vunpack.c.h.b16 %v518
        %v758 = vunpack.c.l.b16 %v519
        %v759 = vunpack.c.h.b16 %v519
        %v760 = vunpack.c.l.b16 %v520
        %v761 = vunpack.c.h.b16 %v520
        %v762 = vunpack.c.l.b16 %v521
        %v763 = vunpack.c.h.b16 %v521
        %v764 = vunpack.c.l.b16 %v522
        %v765 = vunpack.c.h.b16 %v522
        %v766 = vunpack.c.l.b16 %v523
        %v767 = vunpack.c.h.b16 %v523
        %v768 = vunpack.c.l.b16 %v524
        %v769 = vunpack.c.h.b16 %v524
        %v770 = vunpack.c.l.b16 %v525
        %v771 = vunpack.c.h.b16 %v525
        %v772 = vunpack.c.l.b16 %v526
        %v773 = vunpack.c.h.b16 %v526
        %v774 = vunpack.c.l.b16 %v527
        %v775 = vunpack.c.h.b16 %v527
        %v776 = vunpack.c.l.b16 %v528
        %v777 = vunpack.c.h.b16 %v528
        %v778 = vunpack.c.l.b16 %v529
        %v779 = vunpack.c.h.b16 %v529
        %v780 = vunpack.c.l.b16 %v530
        %v781 = vunpack.c.h.b16 %v530
        %v782 = vunpack.c.l.b16 %v531
        %v783 = vunpack.c.h.b16 %v531
        %v784 = vpack.c.b16 %v694, %v688
        %v785 = vpack.c.b16 %v695, %v689
        %v786 = vpack.c.b16 %v696, %v690
        %v787 = vpack.c.b16 %v697, %v691
        %v788 = vpack.c.b16 %v698, %v692
        %v789 = vpack.c.b16 %v699, %v693
        %v790 = vpack.c.b16 %v706, %v700
        %v791 = vpack.c.b16 %v707, %v701
        %v792 = vpack.c.b16 %v708, %v702
        %v793 = vpack.c.b16 %v709, %v703
        %v794 = vpack.c.b16 %v710, %v704
        %v795 = vpack.c.b16 %v711, %v705
        %v796 = vpack.c.b16 %v718, %v712
        %v797 = vpack.c.b16 %v719, %v713
        %v798 = vpack.c.b16 %v720, %v714
        %v799 = vpack.c.b16 %v721, %v715
        %v800 = vpack.c.b16 %v722, %v716
        %v801 = vpack.c.b16 %v723, %v717
        %v802 = vpack.c.b16 %v730, %v724
        %v803 = vpack.c.b16 %v731, %v725
        %v804 = vpack.c.b16 %v732, %v726
        %v805 = vpack.c.b16 %v733, %v727
        %v806 = vpack.c.b16 %v734, %v728
        %v807 = vpack.c.b16 %v735, %v729
        %v808 = vpack.c.b16 %v742, %v736
        %v809 = vpack.c.b16 %v743, %v737
        %v810 = vpack.c.b16 %v744, %v738
        %v811 = vpack.c.b16 %v745, %v739
        %v812 = vpack.c.b16 %v746, %v740
        %v813 = vpack.c.b16 %v747, %v741
        %v814 = vpack.c.b16 %v754, %v748
        %v815 = vpack.c.b16 %v755, %v749
        %v816 = vpack.c.b16 %v756, %v750
        %v817 = vpack.c.b16 %v757, %v751
        %v818 = vpack.c.b16 %v758, %v752
        %v819 = vpack.c.b16 %v759, %v753
        %v820 = vpack.c.b16 %v766, %v760
        %v821 = vpack.c.b16 %v767, %v761
        %v822 = vpack.c.b16 %v768, %v762
        %v823 = vpack.c.b16 %v769, %v763
        %v824 = vpack.c.b16 %v770, %v764
        %v825 = vpack.c.b16 %v771, %v765
        %v826 = vpack.c.b16 %v778, %v772
        %v827 = vpack.c.b16 %v779, %v773
        %v828 = vpack.c.b16 %v780, %v774
        %v829 = vpack.c.b16 %v781, %v775
        %v830 = vpack.c.b16 %v782, %v776
        %v831 = vpack.c.b16 %v783, %v777
        %v976 = vunpack.c.l.b16 %v532
        %v977 = vunpack.c.h.b16 %v532
        %v978 = vunpack.c.l.b16 %v533
        %v979 = vunpack.c.h.b16 %v533
        %v980 = vunpack.c.l.b16 %v534
        %v981 = vunpack.c.h.b16 %v534
        %v982 = vunpack.c.l.b16 %v535
        %v983 = vunpack.c.h.b16 %v535
        %v984 = vunpack.c.l.b16 %v536
        %v985 = vunpack.c.h.b16 %v536
        %v986 = vunpack.c.l.b16 %v537
        %v987 = vunpack.c.h.b16 %v537
        %v988 = vunpack.c.l.b16 %v538
        %v989 = vunpack.c.h.b16 %v538
        %v990 = vunpack.c.l.b16 %v539
        %v991 = vunpack.c.h.b16 %v539
        %v992 = vunpack.c.l.b16 %v540
        %v993 = vunpack.c.h.b16 %v540
        %v994 = vunpack.c.l.b16 %v541
        %v995 = vunpack.c.h.b16 %v541
        %v996 = vunpack.c.l.b16 %v542
        %v997 = vunpack.c.h.b16 %v542
        %v998 = vunpack.c.l.b16 %v543
        %v999 = vunpack.c.h.b16 %v543
        %v1000 = vunpack.c.l.b16 %v544
        %v1001 = vunpack.c.h.b16 %v544
        %v1002 = vunpack.c.l.b16 %v545
        %v1003 = vunpack.c.h.b16 %v545
        %v1004 = vunpack.c.l.b16 %v546
        %v1005 = vunpack.c.h.b16 %v546
        %v1006 = vunpack.c.l.b16 %v547
        %v1007 = vunpack.c.h.b16 %v547
        %v1008 = vunpack.c.l.b16 %v548
        %v1009 = vunpack.c.h.b16 %v548
        %v1010 = vunpack.c.l.b16 %v549
        %v1011 = vunpack.c.h.b16 %v549
        %v1012 = vunpack.c.l.b16 %v550
        %v1013 = vunpack.c.h.b16 %v550
        %v1014 = vunpack.c.l.b16 %v551
        %v1015 = vunpack.c.h.b16 %v551
        %v1016 = vunpack.c.l.b16 %v552
        %v1017 = vunpack.c.h.b16 %v552
        %v1018 = vunpack.c.l.b16 %v553
        %v1019 = vunpack.c.h.b16 %v553
        %v1020 = vunpack.c.l.b16 %v554
        %v1021 = vunpack.c.h.b16 %v554
        %v1022 = vunpack.c.l.b16 %v555
        %v1023 = vunpack.c.h.b16 %v555
        %v1024 = vunpack.c.l.b16 %v556
        %v1025 = vunpack.c.h.b16 %v556
        %v1026 = vunpack.c.l.b16 %v557
        %v1027 = vunpack.c.h.b16 %v557
        %v1028 = vunpack.c.l.b16 %v558
        %v1029 = vunpack.c.h.b16 %v558
        %v1030 = vunpack.c.l.b16 %v559
        %v1031 = vunpack.c.h.b16 %v559
        %v1032 = vunpack.c.l.b16 %v560
        %v1033 = vunpack.c.h.b16 %v560
        %v1034 = vunpack.c.l.b16 %v561
        %v1035 = vunpack.c.h.b16 %v561
        %v1036 = vunpack.c.l.b16 %v562
        %v1037 = vunpack.c.h.b16 %v562
        %v1038 = vunpack.c.l.b16 %v563
        %v1039 = vunpack.c.h.b16 %v563
        %v1040 = vunpack.c.l.b16 %v564
        %v1041 = vunpack.c.h.b16 %v564
        %v1042 = vunpack.c.l.b16 %v565
        %v1043 = vunpack.c.h.b16 %v565
        %v1044 = vunpack.c.l.b16 %v566
        %v1045 = vunpack.c.h.b16 %v566
        %v1046 = vunpack.c.l.b16 %v567
        %v1047 = vunpack.c.h.b16 %v567
        %v1048 = vunpack.c.l.b16 %v568
        %v1049 = vunpack.c.h.b16 %v568
        %v1050 = vunpack.c.l.b16 %v569
        %v1051 = vunpack.c.h.b16 %v569
        %v1052 = vunpack.c.l.b16 %v570
        %v1053 = vunpack.c.h.b16 %v570
        %v1054 = vunpack.c.l.b16 %v571
        %v1055 = vunpack.c.h.b16 %v571
        %v1056 = vunpack.c.l.b16 %v572
        %v1057 = vunpack.c.h.b16 %v572
        %v1058 = vunpack.c.l.b16 %v573
        %v1059 = vunpack.c.h.b16 %v573
        %v1060 = vunpack.c.l.b16 %v574
        %v1061 = vunpack.c.h.b16 %v574
        %v1062 = vunpack.c.l.b16 %v575
        %v1063 = vunpack.c.h.b16 %v575
        %v1064 = vunpack.c.l.b16 %v576
        %v1065 = vunpack.c.h.b16 %v576
        %v1066 = vunpack.c.l.b16 %v577
        %v1067 = vunpack.c.h.b16 %v577
        %v1068 = vunpack.c.l.b16 %v578
        %v1069 = vunpack.c.h.b16 %v578
        %v1070 = vunpack.c.l.b16 %v579
        %v1071 = vunpack.c.h.b16 %v579
        %v1072 = vunpack.c.l.b16 %v580
        %v1073 = vunpack.c.h.b16 %v580
        %v1074 = vunpack.c.l.b16 %v581
        %v1075 = vunpack.c.h.b16 %v581
        %v1076 = vunpack.c.l.b16 %v582
        %v1077 = vunpack.c.h.b16 %v582
        %v1078 = vunpack.c.l.b16 %v583
        %v1079 = vunpack.c.h.b16 %v583
        %v1080 = vunpack.c.l.b16 %v584
        %v1081 = vunpack.c.h.b16 %v584
        %v1082 = vunpack.c.l.b16 %v585
        %v1083 = vunpack.c.h.b16 %v585
        %v1084 = vunpack.c.l.b16 %v586
        %v1085 = vunpack.c.h.b16 %v586
        %v1086 = vunpack.c.l.b16 %v587
        %v1087 = vunpack.c.h.b16 %v587
        %v1088 = vunpack.c.l.b16 %v588
        %v1089 = vunpack.c.h.b16 %v588
        %v1090 = vunpack.c.l.b16 %v589
        %v1091 = vunpack.c.h.b16 %v589
        %v1092 = vunpack.c.l.b16 %v590
        %v1093 = vunpack.c.h.b16 %v590
        %v1094 = vunpack.c.l.b16 %v591
        %v1095 = vunpack.c.h.b16 %v591
        %v1096 = vunpack.c.l.b16 %v592
        %v1097 = vunpack.c.h.b16 %v592
        %v1098 = vunpack.c.l.b16 %v593
        %v1099 = vunpack.c.h.b16 %v593
        %v1100 = vunpack.c.l.b16 %v594
        %v1101 = vunpack.c.h.b16 %v594
        %v1102 = vunpack.c.l.b16 %v595
        %v1103 = vunpack.c.h.b16 %v595
        %v1104 = vunpack.c.l.b16 %v596
        %v1105 = vunpack.c.h.b16 %v596
        %v1106 = vunpack.c.l.b16 %v597
        %v1107 = vunpack.c.h.b16 %v597
        %v1108 = vunpack.c.l.b16 %v598
        %v1109 = vunpack.c.h.b16 %v598
        %v1110 = vunpack.c.l.b16 %v599
        %v1111 = vunpack.c.h.b16 %v599
        %v1112 = vunpack.c.l.b16 %v600
        %v1113 = vunpack.c.h.b16 %v600
        %v1114 = vunpack.c.l.b16 %v601
        %v1115 = vunpack.c.h.b16 %v601
        %v1116 = vunpack.c.l.b16 %v602
        %v1117 = vunpack.c.h.b16 %v602
        %v1118 = vunpack.c.l.b16 %v603
        %v1119 = vunpack.c.h.b16 %v603
        %v1120 = vunpack.c.l.b16 %v604
        %v1121 = vunpack.c.h.b16 %v604
        %v1122 = vunpack.c.l.b16 %v605
        %v1123 = vunpack.c.h.b16 %v605
        %v1124 = vunpack.c.l.b16 %v606
        %v1125 = vunpack.c.h.b16 %v606
        %v1126 = vunpack.c.l.b16 %v607
        %v1127 = vunpack.c.h.b16 %v607
        %v1128 = vunpack.c.l.b16 %v608
        %v1129 = vunpack.c.h.b16 %v608
        %v1130 = vunpack.c.l.b16 %v609
        %v1131 = vunpack.c.h.b16 %v609
        %v1132 = vunpack.c.l.b16 %v610
        %v1133 = vunpack.c.h.b16 %v610
        %v1134 = vunpack.c.l.b16 %v611
        %v1135 = vunpack.c.h.b16 %v611
        %v1136 = vunpack.c.l.b16 %v612
        %v1137 = vunpack.c.h.b16 %v612
        %v1138 = vunpack.c.l.b16 %v613
        %v1139 = vunpack.c.h.b16 %v613
        %v1140 = vunpack.c.l.b16 %v614
        %v1141 = vunpack.c.h.b16 %v614
        %v1142 = vunpack.c.l.b16 %v615
        %v1143 = vunpack.c.h.b16 %v615
        %v1144 = vunpack.c.l.b16 %v616
        %v1145 = vunpack.c.h.b16 %v616
        %v1146 = vunpack.c.l.b16 %v617
        %v1147 = vunpack.c.h.b16 %v617
        %v1148 = vunpack.c.l.b16 %v618
        %v1149 = vunpack.c.h.b16 %v618
        %v1150 = vunpack.c.l.b16 %v619
        %v1151 = vunpack.c.h.b16 %v619
        %v1152 = vunpack.c.l.b16 %v620
        %v1153 = vunpack.c.h.b16 %v620
        %v1154 = vunpack.c.l.b16 %v621
        %v1155 = vunpack.c.h.b16 %v621
        %v1156 = vunpack.c.l.b16 %v622
        %v1157 = vunpack.c.h.b16 %v622
        %v1158 = vunpack.c.l.b16 %v623
        %v1159 = vunpack.c.h.b16 %v623
        %v1160 = vunpack.c.l.b16 %v624
        %v1161 = vunpack.c.h.b16 %v624
        %v1162 = vunpack.c.l.b16 %v625
        %v1163 = vunpack.c.h.b16 %v625
        %v1164 = vunpack.c.l.b16 %v626
        %v1165 = vunpack.c.h.b16 %v626
        %v1166 = vunpack.c.l.b16 %v627
        %v1167 = vunpack.c.h.b16 %v627
        %v1168 = vpack.c.b16 %v978, %v976
        %v1169 = vpack.c.b16 %v979, %v977
        %v1170 = vpack.c.b16 %v982, %v980
        %v1171 = vpack.c.b16 %v983, %v981
        %v1172 = vpack.c.b16 %v986, %v984
        %v1173 = vpack.c.b16 %v987, %v985
        %v1174 = vpack.c.b16 %v990, %v988
        %v1175 = vpack.c.b16 %v991, %v989
        %v1176 = vpack.c.b16 %v994, %v992
        %v1177 = vpack.c.b16 %v995, %v993
        %v1178 = vpack.c.b16 %v998, %v996
        %v1179 = vpack.c.b16 %v999, %v997
        %v1180 = vpack.c.b16 %v1002, %v1000
        %v1181 = vpack.c.b16 %v1003, %v1001
        %v1182 = vpack.c.b16 %v1006, %v1004
        %v1183 = vpack.c.b16 %v1007, %v1005
        %v1184 = vpack.c.b16 %v1010, %v1008
        %v1185 = vpack.c.b16 %v1011, %v1009
        %v1186 = vpack.c.b16 %v1014, %v1012
        %v1187 = vpack.c.b16 %v1015, %v1013
        %v1188 = vpack.c.b16 %v1018, %v1016
        %v1189 = vpack.c.b16 %v1019, %v1017
        %v1190 = vpack.c.b16 %v1022, %v1020
        %v1191 = vpack.c.b16 %v1023, %v1021
        %v1192 = vpack.c.b16 %v1026, %v1024
        %v1193 = vpack.c.b16 %v1027, %v1025
        %v1194 = vpack.c.b16 %v1030, %v1028
        %v1195 = vpack.c.b16 %v1031, %v1029
        %v1196 = vpack.c.b16 %v1034, %v1032
        %v1197 = vpack.c.b16 %v1035, %v1033
        %v1198 = vpack.c.b16 %v1038, %v1036
        %v1199 = vpack.c.b16 %v1039, %v1037
        %v1200 = vpack.c.b16 %v1042, %v1040
        %v1201 = vpack.c.b16 %v1043, %v1041
        %v1202 = vpack.c.b16 %v1046, %v1044
        %v1203 = vpack.c.b16 %v1047, %v1045
        %v1204 = vpack.c.b16 %v1050, %v1048
        %v1205 = vpack.c.b16 %v1051, %v1049
        %v1206 = vpack.c.b16 %v1054, %v1052
        %v1207 = vpack.c.b16 %v1055, %v1053
        %v1208 = vpack.c.b16 %v1058, %v1056
        %v1209 = vpack.c.b16 %v1059, %v1057
        %v1210 = vpack.c.b16 %v1062, %v1060
        %v1211 = vpack.c.b16 %v1063, %v1061
        %v1212 = vpack.c.b16 %v1066, %v1064
        %v1213 = vpack.c.b16 %v1067, %v1065
        %v1214 = vpack.c.b16 %v1070, %v1068
        %v1215 = vpack.c.b16 %v1071, %v1069
        %v1216 = vpack.c.b16 %v1074, %v1072
        %v1217 = vpack.c.b16 %v1075, %v1073
        %v1218 = vpack.c.b16 %v1078, %v1076
        %v1219 = vpack.c.b16 %v1079, %v1077
        %v1220 = vpack.c.b16 %v1082, %v1080
        %v1221 = vpack.c.b16 %v1083, %v1081
        %v1222 = vpack.c.b16 %v1086, %v1084
        %v1223 = vpack.c.b16 %v1087, %v1085
        %v1224 = vpack.c.b16 %v1090, %v1088
        %v1225 = vpack.c.b16 %v1091, %v1089
        %v1226 = vpack.c.b16 %v1094, %v1092
        %v1227 = vpack.c.b16 %v1095, %v1093
        %v1228 = vpack.c.b16 %v1098, %v1096
        %v1229 = vpack.c.b16 %v1099, %v1097
        %v1230 = vpack.c.b16 %v1102, %v1100
        %v1231 = vpack.c.b16 %v1103, %v1101
        %v1232 = vpack.c.b16 %v1106, %v1104
        %v1233 = vpack.c.b16 %v1107, %v1105
        %v1234 = vpack.c.b16 %v1110, %v1108
        %v1235 = vpack.c.b16 %v1111, %v1109
        %v1236 = vpack.c.b16 %v1114, %v1112
        %v1237 = vpack.c.b16 %v1115, %v1113
        %v1238 = vpack.c.b16 %v1118, %v1116
        %v1239 = vpack.c.b16 %v1119, %v1117
        %v1240 = vpack.c.b16 %v1122, %v1120
        %v1241 = vpack.c.b16 %v1123, %v1121
        %v1242 = vpack.c.b16 %v1126, %v1124
        %v1243 = vpack.c.b16 %v1127, %v1125
        %v1244 = vpack.c.b16 %v1130, %v1128
        %v1245 = vpack.c.b16 %v1131, %v1129
        %v1246 = vpack.c.b16 %v1134, %v1132
        %v1247 = vpack.c.b16 %v1135, %v1133
        %v1248 = vpack.c.b16 %v1138, %v1136
        %v1249 = vpack.c.b16 %v1139, %v1137
        %v1250 = vpack.c.b16 %v1142, %v1140
        %v1251 = vpack.c.b16 %v1143, %v1141
        %v1252 = vpack.c.b16 %v1146, %v1144
        %v1253 = vpack.c.b16 %v1147, %v1145
        %v1254 = vpack.c.b16 %v1150, %v1148
        %v1255 = vpack.c.b16 %v1151, %v1149
        %v1256 = vpack.c.b16 %v1154, %v1152
        %v1257 = vpack.c.b16 %v1155, %v1153
        %v1258 = vpack.c.b16 %v1158, %v1156
        %v1259 = vpack.c.b16 %v1159, %v1157
        %v1260 = vpack.c.b16 %v1162, %v1160
        %v1261 = vpack.c.b16 %v1163, %v1161
        %v1262 = vpack.c.b16 %v1166, %v1164
        %v1263 = vpack.c.b16 %v1167, %v1165
        %1360 = vmatprep.subr.bf16.mxu0 %v1169
        %1361 = vmatpush1.bf16.msra.mxu0 %v1168
        %1362 = vmatprep.subr.bf16.mxu0 %v1171
        %1363 = vmatpush1.bf16.msra.mxu0 %v1170
        %1364 = vmatprep.subr.bf16.mxu0 %v1173
        %1365 = vmatpush1.bf16.msra.mxu0 %v1172
        %1366 = vmatprep.subr.bf16.mxu0 %v1175
        %1367 = vmatpush1.bf16.msra.mxu0 %v1174
        %1368 = vmatprep.subr.bf16.mxu0 %v1177
        %1369 = vmatpush1.bf16.msra.mxu0 %v1176
        %1370 = vmatprep.subr.bf16.mxu0 %v1179
        %1371 = vmatpush1.bf16.msra.mxu0 %v1178
        %1372 = vmatprep.subr.bf16.mxu0 %v1181
        %1373 = vmatpush1.bf16.msra.mxu0 %v1180
        %1374 = vmatprep.subr.bf16.mxu0 %v1183
        %1375 = vmatpush1.bf16.msra.mxu0 %v1182
        %1376 = vmatprep.subr.bf16.mxu0 %v1185
        %1377 = vmatpush1.bf16.msra.mxu0 %v1184
        %1378 = vmatprep.subr.bf16.mxu0 %v1187
        %1379 = vmatpush1.bf16.msra.mxu0 %v1186
        %1380 = vmatprep.subr.bf16.mxu0 %v1189
        %1381 = vmatpush1.bf16.msra.mxu0 %v1188
        %1382 = vmatprep.subr.bf16.mxu0 %v1191
        %1383 = vmatpush1.bf16.msra.mxu0 %v1190
        %1384 = vmatprep.subr.bf16.mxu0 %v1193
        %1385 = vmatpush1.bf16.msra.mxu0 %v1192
        %1386 = vmatprep.subr.bf16.mxu0 %v1195
        %1387 = vmatpush1.bf16.msra.mxu0 %v1194
        %1388 = vmatprep.subr.bf16.mxu0 %v1197
        %1389 = vmatpush1.bf16.msra.mxu0 %v1196
        %1390 = vmatprep.subr.bf16.mxu0 %v1199
        %1391 = vmatpush1.bf16.msra.mxu0 %v1198
        %1392 = vmatprep.mubr.bf16.mxu0 %v785
        %1393 = vmatmul.mubr.bf16.gmra.mrb[0].mxu0 %v784
        %v1394 = vpop.f32.mrb[0].mxu0
        %v1395 = vadd.f32 %v633, %v1394
        %v1396 = vpop.f32.mrb[0].mxu0
        %v1397 = vadd.f32 %v637, %v1396
        %v1398 = vpop.f32.mrb[0].mxu0
        %v1399 = vadd.f32 %v633, %v1398
        %v1400 = vpop.f32.mrb[0].mxu0
        %v1401 = vadd.f32 %v637, %v1400
        %1402 = vmatprep.mubr.bf16.mxu0 %v791
        %1403 = vmatmul.mubr.bf16.gmra.mrb[0].mxu0 %v790
        %v1404 = vpop.f32.mrb[0].mxu0
        %v1405 = vadd.f32 %v633, %v1404
        %v1406 = vpop.f32.mrb[0].mxu0
        %v1407 = vadd.f32 %v637, %v1406
        %v1408 = vpop.f32.mrb[0].mxu0
        %v1409 = vadd.f32 %v633, %v1408
        %v1410 = vpop.f32.mrb[0].mxu0
        %v1411 = vadd.f32 %v637, %v1410
        %1412 = vmatprep.mubr.bf16.mxu0 %v797
        %1413 = vmatmul.mubr.bf16.gmra.mrb[0].mxu0 %v796
        %v1414 = vpop.f32.mrb[0].mxu0
        %v1415 = vadd.f32 %v633, %v1414
        %v1416 = vpop.f32.mrb[0].mxu0
        %v1417 = vadd.f32 %v637, %v1416
        %v1418 = vpop.f32.mrb[0].mxu0
        %v1419 = vadd.f32 %v633, %v1418
        %v1420 = vpop.f32.mrb[0].mxu0
        %v1421 = vadd.f32 %v637, %v1420
        %1422 = vmatprep.mubr.bf16.mxu0 %v803
        %1423 = vmatmul.mubr.bf16.gmra.mrb[0].mxu0 %v802
        %v1424 = vpop.f32.mrb[0].mxu0
        %v1425 = vadd.f32 %v633, %v1424
        %v1426 = vpop.f32.mrb[0].mxu0
        %v1427 = vadd.f32 %v637, %v1426
        %v1428 = vpop.f32.mrb[0].mxu0
        %v1429 = vadd.f32 %v633, %v1428
        %v1430 = vpop.f32.mrb[0].mxu0
        %v1431 = vadd.f32 %v637, %v1430
        %1432 = vmatprep.mubr.bf16.mxu0 %v809
        %1433 = vmatmul.mubr.bf16.gmra.mrb[0].mxu0 %v808
        %v1434 = vpop.f32.mrb[0].mxu0
        %v1435 = vadd.f32 %v633, %v1434
        %v1436 = vpop.f32.mrb[0].mxu0
        %v1437 = vadd.f32 %v637, %v1436
        %v1438 = vpop.f32.mrb[0].mxu0
        %v1439 = vadd.f32 %v633, %v1438
        %v1440 = vpop.f32.mrb[0].mxu0
        %v1441 = vadd.f32 %v637, %v1440
        %1442 = vmatprep.mubr.bf16.mxu0 %v815
        %1443 = vmatmul.mubr.bf16.gmra.mrb[0].mxu0 %v814
        %v1444 = vpop.f32.mrb[0].mxu0
        %v1445 = vadd.f32 %v633, %v1444
        %v1446 = vpop.f32.mrb[0].mxu0
        %v1447 = vadd.f32 %v637, %v1446
        %v1448 = vpop.f32.mrb[0].mxu0
        %v1449 = vadd.f32 %v633, %v1448
        %v1450 = vpop.f32.mrb[0].mxu0
        %v1451 = vadd.f32 %v637, %v1450
        %1452 = vmatprep.mubr.bf16.mxu0 %v821
        %1453 = vmatmul.mubr.bf16.gmra.mrb[0].mxu0 %v820
        %v1454 = vpop.f32.mrb[0].mxu0
        %v1455 = vadd.f32 %v633, %v1454
        %v1456 = vpop.f32.mrb[0].mxu0
        %v1457 = vadd.f32 %v637, %v1456
        %v1458 = vpop.f32.mrb[0].mxu0
        %v1459 = vadd.f32 %v633, %v1458
        %v1460 = vpop.f32.mrb[0].mxu0
        %v1461 = vadd.f32 %v637, %v1460
        %1462 = vmatprep.mubr.bf16.mxu0 %v827
        %1463 = vmatmul.mubr.bf16.gmra.mrb[0].mxu0 %v826
        %v1464 = vpop.f32.mrb[0].mxu0
        %v1465 = vadd.f32 %v633, %v1464
        %v1466 = vpop.f32.mrb[0].mxu0
        %v1467 = vadd.f32 %v637, %v1466
        %v1468 = vpop.f32.mrb[0].mxu0
        %v1469 = vadd.f32 %v633, %v1468
        %v1470 = vpop.f32.mrb[0].mxu0
        %v1471 = vadd.f32 %v637, %v1470
        %1472 = vdwg.mxu0
        %1473 = vmatprep.subr.bf16.mxu0 %v1201
        %1474 = vmatpush1.bf16.msra.mxu0 %v1200
        %1475 = vmatprep.subr.bf16.mxu0 %v1203
        %1476 = vmatpush1.bf16.msra.mxu0 %v1202
        %1477 = vmatprep.subr.bf16.mxu0 %v1205
        %1478 = vmatpush1.bf16.msra.mxu0 %v1204
        %1479 = vmatprep.subr.bf16.mxu0 %v1207
        %1480 = vmatpush1.bf16.msra.mxu0 %v1206
        %1481 = vmatprep.subr.bf16.mxu0 %v1209
        %1482 = vmatpush1.bf16.msra.mxu0 %v1208
        %1483 = vmatprep.subr.bf16.mxu0 %v1211
        %1484 = vmatpush1.bf16.msra.mxu0 %v1210
        %1485 = vmatprep.subr.bf16.mxu0 %v1213
        %1486 = vmatpush1.bf16.msra.mxu0 %v1212
        %1487 = vmatprep.subr.bf16.mxu0 %v1215
        %1488 = vmatpush1.bf16.msra.mxu0 %v1214
        %1489 = vmatprep.subr.bf16.mxu0 %v1217
        %1490 = vmatpush1.bf16.msra.mxu0 %v1216
        %1491 = vmatprep.subr.bf16.mxu0 %v1219
        %1492 = vmatpush1.bf16.msra.mxu0 %v1218
        %1493 = vmatprep.subr.bf16.mxu0 %v1221
        %1494 = vmatpush1.bf16.msra.mxu0 %v1220
        %1495 = vmatprep.subr.bf16.mxu0 %v1223
        %1496 = vmatpush1.bf16.msra.mxu0 %v1222
        %1497 = vmatprep.subr.bf16.mxu0 %v1225
        %1498 = vmatpush1.bf16.msra.mxu0 %v1224
        %1499 = vmatprep.subr.bf16.mxu0 %v1227
        %1500 = vmatpush1.bf16.msra.mxu0 %v1226
        %1501 = vmatprep.subr.bf16.mxu0 %v1229
        %1502 = vmatpush1.bf16.msra.mxu0 %v1228
        %1503 = vmatprep.subr.bf16.mxu0 %v1231
        %1504 = vmatpush1.bf16.msra.mxu0 %v1230
        %1505 = vmatprep.mubr.bf16.mxu0 %v787
        %1506 = vmatmul.mubr.bf16.gmra.mrb[0].mxu0 %v786
        %v1507 = vpop.f32.mrb[0].mxu0
        %v1508 = vadd.f32 %v1395, %v1507
        %v1509 = vpop.f32.mrb[0].mxu0
        %v1510 = vadd.f32 %v1397, %v1509
        %v1511 = vpop.f32.mrb[0].mxu0
        %v1512 = vadd.f32 %v1399, %v1511
        %v1513 = vpop.f32.mrb[0].mxu0
        %v1514 = vadd.f32 %v1401, %v1513
        %1515 = vmatprep.mubr.bf16.mxu0 %v793
        %1516 = vmatmul.mubr.bf16.gmra.mrb[0].mxu0 %v792
        %v1517 = vpop.f32.mrb[0].mxu0
        %v1518 = vadd.f32 %v1405, %v1517
        %v1519 = vpop.f32.mrb[0].mxu0
        %v1520 = vadd.f32 %v1407, %v1519
        %v1521 = vpop.f32.mrb[0].mxu0
        %v1522 = vadd.f32 %v1409, %v1521
        %v1523 = vpop.f32.mrb[0].mxu0
        %v1524 = vadd.f32 %v1411, %v1523
        %1525 = vmatprep.mubr.bf16.mxu0 %v799
        %1526 = vmatmul.mubr.bf16.gmra.mrb[0].mxu0 %v798
        %v1527 = vpop.f32.mrb[0].mxu0
        %v1528 = vadd.f32 %v1415, %v1527
        %v1529 = vpop.f32.mrb[0].mxu0
        %v1530 = vadd.f32 %v1417, %v1529
        %v1531 = vpop.f32.mrb[0].mxu0
        %v1532 = vadd.f32 %v1419, %v1531
        %v1533 = vpop.f32.mrb[0].mxu0
        %v1534 = vadd.f32 %v1421, %v1533
        %1535 = vmatprep.mubr.bf16.mxu0 %v805
        %1536 = vmatmul.mubr.bf16.gmra.mrb[0].mxu0 %v804
        %v1537 = vpop.f32.mrb[0].mxu0
        %v1538 = vadd.f32 %v1425, %v1537
        %v1539 = vpop.f32.mrb[0].mxu0
        %v1540 = vadd.f32 %v1427, %v1539
        %v1541 = vpop.f32.mrb[0].mxu0
        %v1542 = vadd.f32 %v1429, %v1541
        %v1543 = vpop.f32.mrb[0].mxu0
        %v1544 = vadd.f32 %v1431, %v1543
        %1545 = vmatprep.mubr.bf16.mxu0 %v811
        %1546 = vmatmul.mubr.bf16.gmra.mrb[0].mxu0 %v810
        %v1547 = vpop.f32.mrb[0].mxu0
        %v1548 = vadd.f32 %v1435, %v1547
        %v1549 = vpop.f32.mrb[0].mxu0
        %v1550 = vadd.f32 %v1437, %v1549
        %v1551 = vpop.f32.mrb[0].mxu0
        %v1552 = vadd.f32 %v1439, %v1551
        %v1553 = vpop.f32.mrb[0].mxu0
        %v1554 = vadd.f32 %v1441, %v1553
        %1555 = vmatprep.mubr.bf16.mxu0 %v817
        %1556 = vmatmul.mubr.bf16.gmra.mrb[0].mxu0 %v816
        %v1557 = vpop.f32.mrb[0].mxu0
        %v1558 = vadd.f32 %v1445, %v1557
        %v1559 = vpop.f32.mrb[0].mxu0
        %v1560 = vadd.f32 %v1447, %v1559
        %v1561 = vpop.f32.mrb[0].mxu0
        %v1562 = vadd.f32 %v1449, %v1561
        %v1563 = vpop.f32.mrb[0].mxu0
        %v1564 = vadd.f32 %v1451, %v1563
        %1565 = vmatprep.mubr.bf16.mxu0 %v823
        %1566 = vmatmul.mubr.bf16.gmra.mrb[0].mxu0 %v822
        %v1567 = vpop.f32.mrb[0].mxu0
        %v1568 = vadd.f32 %v1455, %v1567
        %v1569 = vpop.f32.mrb[0].mxu0
        %v1570 = vadd.f32 %v1457, %v1569
        %v1571 = vpop.f32.mrb[0].mxu0
        %v1572 = vadd.f32 %v1459, %v1571
        %v1573 = vpop.f32.mrb[0].mxu0
        %v1574 = vadd.f32 %v1461, %v1573
        %1575 = vmatprep.mubr.bf16.mxu0 %v829
        %1576 = vmatmul.mubr.bf16.gmra.mrb[0].mxu0 %v828
        %v1577 = vpop.f32.mrb[0].mxu0
        %v1578 = vadd.f32 %v1465, %v1577
        %v1579 = vpop.f32.mrb[0].mxu0
        %v1580 = vadd.f32 %v1467, %v1579
        %v1581 = vpop.f32.mrb[0].mxu0
        %v1582 = vadd.f32 %v1469, %v1581
        %v1583 = vpop.f32.mrb[0].mxu0
        %v1584 = vadd.f32 %v1471, %v1583
        %1585 = vdwg.mxu0
        %1586 = vmatprep.subr.bf16.mxu0 %v1233
        %1587 = vmatpush1.bf16.msra.mxu0 %v1232
        %1588 = vmatprep.subr.bf16.mxu0 %v1235
        %1589 = vmatpush1.bf16.msra.mxu0 %v1234
        %1590 = vmatprep.subr.bf16.mxu0 %v1237
        %1591 = vmatpush1.bf16.msra.mxu0 %v1236
        %1592 = vmatprep.subr.bf16.mxu0 %v1239
        %1593 = vmatpush1.bf16.msra.mxu0 %v1238
        %1594 = vmatprep.subr.bf16.mxu0 %v1241
        %1595 = vmatpush1.bf16.msra.mxu0 %v1240
        %1596 = vmatprep.subr.bf16.mxu0 %v1243
        %1597 = vmatpush1.bf16.msra.mxu0 %v1242
        %1598 = vmatprep.subr.bf16.mxu0 %v1245
        %1599 = vmatpush1.bf16.msra.mxu0 %v1244
        %1600 = vmatprep.subr.bf16.mxu0 %v1247
        %1601 = vmatpush1.bf16.msra.mxu0 %v1246
        %1602 = vmatprep.subr.bf16.mxu0 %v1249
        %1603 = vmatpush1.bf16.msra.mxu0 %v1248
        %1604 = vmatprep.subr.bf16.mxu0 %v1251
        %1605 = vmatpush1.bf16.msra.mxu0 %v1250
        %1606 = vmatprep.subr.bf16.mxu0 %v1253
        %1607 = vmatpush1.bf16.msra.mxu0 %v1252
        %1608 = vmatprep.subr.bf16.mxu0 %v1255
        %1609 = vmatpush1.bf16.msra.mxu0 %v1254
        %1610 = vmatprep.subr.bf16.mxu0 %v1257
        %1611 = vmatpush1.bf16.msra.mxu0 %v1256
        %1612 = vmatprep.subr.bf16.mxu0 %v1259
        %1613 = vmatpush1.bf16.msra.mxu0 %v1258
        %1614 = vmatprep.subr.bf16.mxu0 %v1261
        %1615 = vmatpush1.bf16.msra.mxu0 %v1260
        %1616 = vmatprep.subr.bf16.mxu0 %v1263
        %1617 = vmatpush1.bf16.msra.mxu0 %v1262
        %1618 = vmatprep.mubr.bf16.mxu0 %v789
        %1619 = vmatmul.mubr.bf16.gmra.mrb[0].mxu0 %v788
        %v1620 = vpop.f32.mrb[0].mxu0
        %v1621 = vadd.f32 %v1508, %v1620
        %v1622 = vpop.f32.mrb[0].mxu0
        %v1623 = vadd.f32 %v1510, %v1622
        %v1624 = vpop.f32.mrb[0].mxu0
        %v1625 = vadd.f32 %v1512, %v1624
        %v1626 = vpop.f32.mrb[0].mxu0
        %v1627 = vadd.f32 %v1514, %v1626
        %1628 = vmatprep.mubr.bf16.mxu0 %v795
        %1629 = vmatmul.mubr.bf16.gmra.mrb[0].mxu0 %v794
        %v1630 = vpop.f32.mrb[0].mxu0
        %v1631 = vadd.f32 %v1518, %v1630
        %v1632 = vpop.f32.mrb[0].mxu0
        %v1633 = vadd.f32 %v1520, %v1632
        %v1634 = vpop.f32.mrb[0].mxu0
        %v1635 = vadd.f32 %v1522, %v1634
        %v1636 = vpop.f32.mrb[0].mxu0
        %v1637 = vadd.f32 %v1524, %v1636
        %1638 = vmatprep.mubr.bf16.mxu0 %v801
        %1639 = vmatmul.mubr.bf16.gmra.mrb[0].mxu0 %v800
        %v1640 = vpop.f32.mrb[0].mxu0
        %v1641 = vadd.f32 %v1528, %v1640
        %v1642 = vpop.f32.mrb[0].mxu0
        %v1643 = vadd.f32 %v1530, %v1642
        %v1644 = vpop.f32.mrb[0].mxu0
        %v1645 = vadd.f32 %v1532, %v1644
        %v1646 = vpop.f32.mrb[0].mxu0
        %v1647 = vadd.f32 %v1534, %v1646
        %1648 = vmatprep.mubr.bf16.mxu0 %v807
        %1649 = vmatmul.mubr.bf16.gmra.mrb[0].mxu0 %v806
        %v1650 = vpop.f32.mrb[0].mxu0
        %v1651 = vadd.f32 %v1538, %v1650
        %v1652 = vpop.f32.mrb[0].mxu0
        %v1653 = vadd.f32 %v1540, %v1652
        %v1654 = vpop.f32.mrb[0].mxu0
        %v1655 = vadd.f32 %v1542, %v1654
        %v1656 = vpop.f32.mrb[0].mxu0
        %v1657 = vadd.f32 %v1544, %v1656
        %1658 = vmatprep.mubr.bf16.mxu0 %v813
        %1659 = vmatmul.mubr.bf16.gmra.mrb[0].mxu0 %v812
        %v1660 = vpop.f32.mrb[0].mxu0
        %v1661 = vadd.f32 %v1548, %v1660
        %v1662 = vpop.f32.mrb[0].mxu0
        %v1663 = vadd.f32 %v1550, %v1662
        %v1664 = vpop.f32.mrb[0].mxu0
        %v1665 = vadd.f32 %v1552, %v1664
        %v1666 = vpop.f32.mrb[0].mxu0
        %v1667 = vadd.f32 %v1554, %v1666
        %1668 = vmatprep.mubr.bf16.mxu0 %v819
        %1669 = vmatmul.mubr.bf16.gmra.mrb[0].mxu0 %v818
        %v1670 = vpop.f32.mrb[0].mxu0
        %v1671 = vadd.f32 %v1558, %v1670
        %v1672 = vpop.f32.mrb[0].mxu0
        %v1673 = vadd.f32 %v1560, %v1672
        %v1674 = vpop.f32.mrb[0].mxu0
        %v1675 = vadd.f32 %v1562, %v1674
        %v1676 = vpop.f32.mrb[0].mxu0
        %v1677 = vadd.f32 %v1564, %v1676
        %1678 = vmatprep.mubr.bf16.mxu0 %v825
        %1679 = vmatmul.mubr.bf16.gmra.mrb[0].mxu0 %v824
        %v1680 = vpop.f32.mrb[0].mxu0
        %v1681 = vadd.f32 %v1568, %v1680
        %v1682 = vpop.f32.mrb[0].mxu0
        %v1683 = vadd.f32 %v1570, %v1682
        %v1684 = vpop.f32.mrb[0].mxu0
        %v1685 = vadd.f32 %v1572, %v1684
        %v1686 = vpop.f32.mrb[0].mxu0
        %v1687 = vadd.f32 %v1574, %v1686
        %1688 = vmatprep.mubr.bf16.mxu0 %v831
        %1689 = vmatmul.mubr.bf16.gmra.mrb[0].mxu0 %v830
        %v1690 = vpop.f32.mrb[0].mxu0
        %v1691 = vadd.f32 %v1578, %v1690
        %v1692 = vpop.f32.mrb[0].mxu0
        %v1693 = vadd.f32 %v1580, %v1692
        %v1694 = vpop.f32.mrb[0].mxu0
        %v1695 = vadd.f32 %v1582, %v1694
        %v1696 = vpop.f32.mrb[0].mxu0
        %v1697 = vadd.f32 %v1584, %v1696
        %1698 = vdwg.mxu0
        %v1699 = vpack.c.bf16 %v1625, %v1621
        %v1700 = vpack.c.bf16 %v1627, %v1623
        %v1701 = vpack.c.bf16 %v1635, %v1631
        %v1702 = vpack.c.bf16 %v1637, %v1633
        %v1703 = vpack.c.bf16 %v1645, %v1641
        %v1704 = vpack.c.bf16 %v1647, %v1643
        %v1705 = vpack.c.bf16 %v1655, %v1651
        %v1706 = vpack.c.bf16 %v1657, %v1653
        %v1707 = vpack.c.bf16 %v1665, %v1661
        %v1708 = vpack.c.bf16 %v1667, %v1663
        %v1709 = vpack.c.bf16 %v1675, %v1671
        %v1710 = vpack.c.bf16 %v1677, %v1673
        %v1711 = vpack.c.bf16 %v1685, %v1681
        %v1712 = vpack.c.bf16 %v1687, %v1683
        %v1713 = vpack.c.bf16 %v1695, %v1691
        %v1714 = vpack.c.bf16 %v1697, %v1693
        %v1715 = vld [vmem:[%s3] sm:$0xf]
        %v1716 = vld [vmem:[%s3 + $0x4] sm:$0xf]
        %v1717 = vld [vmem:[%s3 + $0x8] sm:$0xf]
        %v1718 = vld [vmem:[%s3 + $0xc] sm:$0xf]
        %v1719 = vld [vmem:[%s3 + $0x10] sm:$0xf]
        %v1720 = vld [vmem:[%s3 + $0x14] sm:$0xf]
        %v1721 = vld [vmem:[%s3 + $0x18] sm:$0xf]
        %v1722 = vld [vmem:[%s3 + $0x1c] sm:$0xf]
        %v1723 = vld [vmem:[%s3 + $0x20] sm:$0xf]
        %v1724 = vld [vmem:[%s3 + $0x24] sm:$0xf]
        %v1725 = vld [vmem:[%s3 + $0x28] sm:$0xf]
        %v1726 = vld [vmem:[%s3 + $0x2c] sm:$0xf]
        %v1727 = vld [vmem:[%s3 + $0x30] sm:$0xf]
        %v1728 = vld [vmem:[%s3 + $0x34] sm:$0xf]
        %v1729 = vld [vmem:[%s3 + $0x38] sm:$0xf]
        %v1730 = vld [vmem:[%s3 + $0x3c] sm:$0xf]
        %v1731 = vld [vmem:[%s3 + $0x40] sm:$0xf]
        %v1732 = vld [vmem:[%s3 + $0x44] sm:$0xf]
        %v1733 = vld [vmem:[%s3 + $0x48] sm:$0xf]
        %v1734 = vld [vmem:[%s3 + $0x4c] sm:$0xf]
        %v1735 = vld [vmem:[%s3 + $0x50] sm:$0xf]
        %v1736 = vld [vmem:[%s3 + $0x54] sm:$0xf]
        %v1737 = vld [vmem:[%s3 + $0x58] sm:$0xf]
        %v1738 = vld [vmem:[%s3 + $0x5c] sm:$0xf]
        %v1739 = vld [vmem:[%s3 + $0x60] sm:$0xf]
        %v1740 = vld [vmem:[%s3 + $0x64] sm:$0xf]
        %v1741 = vld [vmem:[%s3 + $0x68] sm:$0xf]
        %v1742 = vld [vmem:[%s3 + $0x6c] sm:$0xf]
        %v1743 = vld [vmem:[%s3 + $0x70] sm:$0xf]
        %v1744 = vld [vmem:[%s3 + $0x74] sm:$0xf]
        %v1745 = vld [vmem:[%s3 + $0x78] sm:$0xf]
        %v1746 = vld [vmem:[%s3 + $0x7c] sm:$0xf]
        %v1747 = vld [vmem:[%s4] sm:$0x1]
        %v1749 = vlaneseq
        %v1750 = vshrl.u32 %v1749, 7
        %v1751 = vsub.s32 0, %v1750
        %v1752 = vrot.slane %v1747, %v1751
        %v1786 = vunpack.c.l.b16 %v1715
        %v1787 = vunpack.c.l.b16 %v1716
        %v1788 = vunpack.c.l.b16 %v1717
        %v1789 = vunpack.c.l.b16 %v1718
        %v1790 = vunpack.c.l.b16 %v1719
        %v1791 = vunpack.c.l.b16 %v1720
        %v1792 = vunpack.c.l.b16 %v1721
        %v1793 = vunpack.c.l.b16 %v1722
        %v1794 = vunpack.c.l.b16 %v1723
        %v1795 = vunpack.c.l.b16 %v1724
        %v1796 = vunpack.c.l.b16 %v1725
        %v1797 = vunpack.c.l.b16 %v1726
        %v1798 = vunpack.c.l.b16 %v1727
        %v1799 = vunpack.c.l.b16 %v1728
        %v1800 = vunpack.c.l.b16 %v1729
        %v1801 = vunpack.c.l.b16 %v1730
        %v1802 = vunpack.c.l.b16 %v1731
        %v1803 = vunpack.c.l.b16 %v1732
        %v1804 = vunpack.c.l.b16 %v1733
        %v1805 = vunpack.c.l.b16 %v1734
        %v1806 = vunpack.c.l.b16 %v1735
        %v1807 = vunpack.c.l.b16 %v1736
        %v1808 = vunpack.c.l.b16 %v1737
        %v1809 = vunpack.c.l.b16 %v1738
        %v1810 = vunpack.c.l.b16 %v1739
        %v1811 = vunpack.c.l.b16 %v1740
        %v1812 = vunpack.c.l.b16 %v1741
        %v1813 = vunpack.c.l.b16 %v1742
        %v1814 = vunpack.c.l.b16 %v1743
        %v1815 = vunpack.c.l.b16 %v1744
        %v1816 = vunpack.c.l.b16 %v1745
        %v1817 = vunpack.c.l.b16 %v1746
        %v1818 = vpack.c.b16 %v1787, %v1786
        %v1819 = vpack.c.b16 %v1789, %v1788
        %v1820 = vpack.c.b16 %v1791, %v1790
        %v1821 = vpack.c.b16 %v1793, %v1792
        %v1822 = vpack.c.b16 %v1795, %v1794
        %v1823 = vpack.c.b16 %v1797, %v1796
        %v1824 = vpack.c.b16 %v1799, %v1798
        %v1825 = vpack.c.b16 %v1801, %v1800
        %v1826 = vpack.c.b16 %v1803, %v1802
        %v1827 = vpack.c.b16 %v1805, %v1804
        %v1828 = vpack.c.b16 %v1807, %v1806
        %v1829 = vpack.c.b16 %v1809, %v1808
        %v1830 = vpack.c.b16 %v1811, %v1810
        %v1831 = vpack.c.b16 %v1813, %v1812
        %v1832 = vpack.c.b16 %v1815, %v1814
        %v1833 = vpack.c.b16 %v1817, %v1816
        %1850 = vmatprep.subr.bf16.mxu0 0
        %1851 = vmatpush1.bf16.msra.mxu0 %v1818
        %1852 = vmatprep.subr.bf16.mxu0 0
        %1853 = vmatpush1.bf16.msra.mxu0 %v1819
        %1854 = vmatprep.subr.bf16.mxu0 0
        %1855 = vmatpush1.bf16.msra.mxu0 %v1820
        %1856 = vmatprep.subr.bf16.mxu0 0
        %1857 = vmatpush1.bf16.msra.mxu0 %v1821
        %1858 = vmatprep.subr.bf16.mxu0 0
        %1859 = vmatpush1.bf16.msra.mxu0 %v1822
        %1860 = vmatprep.subr.bf16.mxu0 0
        %1861 = vmatpush1.bf16.msra.mxu0 %v1823
        %1862 = vmatprep.subr.bf16.mxu0 0
        %1863 = vmatpush1.bf16.msra.mxu0 %v1824
        %1864 = vmatprep.subr.bf16.mxu0 0
        %1865 = vmatpush1.bf16.msra.mxu0 %v1825
        %1866 = vmatprep.subr.bf16.mxu0 0
        %1867 = vmatpush1.bf16.msra.mxu0 %v1826
        %1868 = vmatprep.subr.bf16.mxu0 0
        %1869 = vmatpush1.bf16.msra.mxu0 %v1827
        %1870 = vmatprep.subr.bf16.mxu0 0
        %1871 = vmatpush1.bf16.msra.mxu0 %v1828
        %1872 = vmatprep.subr.bf16.mxu0 0
        %1873 = vmatpush1.bf16.msra.mxu0 %v1829
        %1874 = vmatprep.subr.bf16.mxu0 0
        %1875 = vmatpush1.bf16.msra.mxu0 %v1830
        %1876 = vmatprep.subr.bf16.mxu0 0
        %1877 = vmatpush1.bf16.msra.mxu0 %v1831
        %1878 = vmatprep.subr.bf16.mxu0 0
        %1879 = vmatpush1.bf16.msra.mxu0 %v1832
        %1880 = vmatprep.subr.bf16.mxu0 0
        %1881 = vmatpush1.bf16.msra.mxu0 %v1833
        %1882 = vmatprep.mubr.bf16.mxu0 %v1700
        %1883 = vmatmul.mubr.bf16.gmra.mrb[0].mxu0 %v1699
        %v1884 = vpop.f32.mrb[0].mxu0
        %v1885 = vadd.f32 %v1752, %v1884
        %v1886 = vpop.f32.mrb[0].mxu0
        %v1887 = vpop.f32.mrb[0].mxu0
        %v1888 = vadd.f32 %v1752, %v1887
        %v1889 = vpop.f32.mrb[0].mxu0
        %1890 = vmatprep.mubr.bf16.mxu0 %v1702
        %1891 = vmatmul.mubr.bf16.gmra.mrb[0].mxu0 %v1701
        %v1892 = vpop.f32.mrb[0].mxu0
        %v1893 = vadd.f32 %v1752, %v1892
        %v1894 = vpop.f32.mrb[0].mxu0
        %v1895 = vpop.f32.mrb[0].mxu0
        %v1896 = vadd.f32 %v1752, %v1895
        %v1897 = vpop.f32.mrb[0].mxu0
        %1898 = vmatprep.mubr.bf16.mxu0 %v1704
        %1899 = vmatmul.mubr.bf16.gmra.mrb[0].mxu0 %v1703
        %v1900 = vpop.f32.mrb[0].mxu0
        %v1901 = vadd.f32 %v1752, %v1900
        %v1902 = vpop.f32.mrb[0].mxu0
        %v1903 = vpop.f32.mrb[0].mxu0
        %v1904 = vadd.f32 %v1752, %v1903
        %v1905 = vpop.f32.mrb[0].mxu0
        %1906 = vmatprep.mubr.bf16.mxu0 %v1706
        %1907 = vmatmul.mubr.bf16.gmra.mrb[0].mxu0 %v1705
        %v1908 = vpop.f32.mrb[0].mxu0
        %v1909 = vadd.f32 %v1752, %v1908
        %v1910 = vpop.f32.mrb[0].mxu0
        %v1911 = vpop.f32.mrb[0].mxu0
        %v1912 = vadd.f32 %v1752, %v1911
        %v1913 = vpop.f32.mrb[0].mxu0
        %1914 = vmatprep.mubr.bf16.mxu0 %v1708
        %1915 = vmatmul.mubr.bf16.gmra.mrb[0].mxu0 %v1707
        %v1916 = vpop.f32.mrb[0].mxu0
        %v1917 = vadd.f32 %v1752, %v1916
        %v1918 = vpop.f32.mrb[0].mxu0
        %v1919 = vpop.f32.mrb[0].mxu0
        %v1920 = vadd.f32 %v1752, %v1919
        %v1921 = vpop.f32.mrb[0].mxu0
        %1922 = vmatprep.mubr.bf16.mxu0 %v1710
        %1923 = vmatmul.mubr.bf16.gmra.mrb[0].mxu0 %v1709
        %v1924 = vpop.f32.mrb[0].mxu0
        %v1925 = vadd.f32 %v1752, %v1924
        %v1926 = vpop.f32.mrb[0].mxu0
        %v1927 = vpop.f32.mrb[0].mxu0
        %v1928 = vadd.f32 %v1752, %v1927
        %v1929 = vpop.f32.mrb[0].mxu0
        %1930 = vmatprep.mubr.bf16.mxu0 %v1712
        %1931 = vmatmul.mubr.bf16.gmra.mrb[0].mxu0 %v1711
        %v1932 = vpop.f32.mrb[0].mxu0
        %v1933 = vadd.f32 %v1752, %v1932
        %v1934 = vpop.f32.mrb[0].mxu0
        %v1935 = vpop.f32.mrb[0].mxu0
        %v1936 = vadd.f32 %v1752, %v1935
        %v1937 = vpop.f32.mrb[0].mxu0
        %1938 = vmatprep.mubr.bf16.mxu0 %v1714
        %1939 = vmatmul.mubr.bf16.gmra.mrb[0].mxu0 %v1713
        %v1940 = vpop.f32.mrb[0].mxu0
        %v1941 = vadd.f32 %v1752, %v1940
        %v1942 = vpop.f32.mrb[0].mxu0
        %v1943 = vpop.f32.mrb[0].mxu0
        %v1944 = vadd.f32 %v1752, %v1943
        %v1945 = vpop.f32.mrb[0].mxu0
        %1946 = vdwg.mxu0
        %v1947 = vpack.c.bf16 %v1888, %v1885
        %v1948 = vpack.c.bf16 %v1896, %v1893
        %v1949 = vpack.c.bf16 %v1904, %v1901
        %v1950 = vpack.c.bf16 %v1912, %v1909
        %v1951 = vpack.c.bf16 %v1920, %v1917
        %v1952 = vpack.c.bf16 %v1928, %v1925
        %v1953 = vpack.c.bf16 %v1936, %v1933
        %v1954 = vpack.c.bf16 %v1944, %v1941
        %v1955 = vld [vmem:[%s5] sm:$0xf]
        %v1956 = vld [vmem:[%s5 + $0x4] sm:$0xf]
        %v1957 = vld [vmem:[%s5 + $0x8] sm:$0xf]
        %v1958 = vld [vmem:[%s5 + $0xc] sm:$0xf]
        %v1959 = vld [vmem:[%s5 + $0x10] sm:$0xf]
        %v1960 = vld [vmem:[%s5 + $0x14] sm:$0xf]
        %v1961 = vld [vmem:[%s5 + $0x18] sm:$0xf]
        %v1962 = vld [vmem:[%s5 + $0x1c] sm:$0xf]
        %v1963 = vld [vmem:[%s6] sm:$0xff]
        %v1964 = vld [vmem:[%s6 + $0x8] sm:$0xff]
        %1966 = vset.pattern.permute.xlu0 0
        %1967 = vperm.xlu0 %1966, %v1963
        %v1968 = vpop.permute.xlu0 %1967
        %1971 = vset.pattern.permute.xlu0 0
        %1972 = vperm.xlu0 %1971, %v1964
        %v1973 = vpop.permute.xlu0 %1972
        %v1983 = vunpack.c.l.b16 %v1955
        %v1984 = vunpack.c.l.b16 %v1956
        %v1985 = vunpack.c.l.b16 %v1957
        %v1986 = vunpack.c.l.b16 %v1958
        %v1987 = vunpack.c.l.b16 %v1959
        %v1988 = vunpack.c.l.b16 %v1960
        %v1989 = vunpack.c.l.b16 %v1961
        %v1990 = vunpack.c.l.b16 %v1962
        %v1991 = vpack.c.b16 %v1984, %v1983
        %v1992 = vpack.c.b16 %v1986, %v1985
        %v1993 = vpack.c.b16 %v1988, %v1987
        %v1994 = vpack.c.b16 %v1990, %v1989
        %1999 = vxpose.xlu0.c.b16.start [1/8] %v1991, 128
        %2000 = vxpose.xlu0.c.b16.cont [2/8] %v1992, 128
        %2001 = vxpose.xlu0.c.b16.cont [3/8] %v1993, 128
        %2002 = vxpose.xlu0.c.b16.cont [4/8] %v1994, 128
        %2003 = vxpose.xlu0.c.b16.cont [5/8] 0, 128
        %2004 = vxpose.xlu0.c.b16.cont [6/8] 0, 128
        %2005 = vxpose.xlu0.c.b16.cont [7/8] 0, 128
        %2006 = vxpose.xlu0.c.b16.end [8/8] 0, 128
        %v2007 = vpop.trf.xlu0
        %v2008 = vpop.trf.xlu0
        %v2009 = vpop.trf.xlu0
        %v2010 = vpop.trf.xlu0
        %v2011 = vpop.trf.xlu0
        %v2012 = vpop.trf.xlu0
        %v2013 = vpop.trf.xlu0
        %v2014 = vpop.trf.xlu0
        %vm2015 = vcmask 523264
        %v2017 = vsel %vm2015, %v2007, 0
        %v2020 = vsel %vm2015, %v1947, 0
        %v2023 = vsel %vm2015, %v1948, 0
        %v2026 = vsel %vm2015, %v1949, 0
        %v2029 = vsel %vm2015, %v1950, 0
        %v2032 = vsel %vm2015, %v1951, 0
        %v2035 = vsel %vm2015, %v1952, 0
        %v2038 = vsel %vm2015, %v1953, 0
        %v2041 = vsel %vm2015, %v1954, 0
        %2043 = vmatprep.subr.bf16.mxu0 0
        %2044 = vmatpush1.bf16.xpose.msra.mxu0 %v2020
        %2045 = vmatprep.subr.bf16.mxu0 0
        %2046 = vmatpush1.bf16.xpose.msra.mxu0 %v2023
        %2047 = vmatprep.subr.bf16.mxu0 0
        %2048 = vmatpush1.bf16.xpose.msra.mxu0 %v2026
        %2049 = vmatprep.subr.bf16.mxu0 0
        %2050 = vmatpush1.bf16.xpose.msra.mxu0 %v2029
        %2051 = vmatprep.subr.bf16.mxu0 0
        %2052 = vmatpush1.bf16.xpose.msra.mxu0 %v2032
        %2053 = vmatprep.subr.bf16.mxu0 0
        %2054 = vmatpush1.bf16.xpose.msra.mxu0 %v2035
        %2055 = vmatprep.subr.bf16.mxu0 0
        %2056 = vmatpush1.bf16.xpose.msra.mxu0 %v2038
        %2057 = vmatprep.subr.bf16.mxu0 0
        %2058 = vmatpush1.bf16.xpose.msra.mxu0 %v2041
        %2059 = vmatprep.subr.bf16.mxu0 0
        %2060 = vmatpush1.bf16.xpose.msra.mxu0 0
        %2061 = vmatprep.subr.bf16.mxu0 0
        %2062 = vmatpush1.bf16.xpose.msra.mxu0 0
        %2063 = vmatprep.subr.bf16.mxu0 0
        %2064 = vmatpush1.bf16.xpose.msra.mxu0 0
        %2065 = vmatprep.subr.bf16.mxu0 0
        %2066 = vmatpush1.bf16.xpose.msra.mxu0 0
        %2067 = vmatprep.subr.bf16.mxu0 0
        %2068 = vmatpush1.bf16.xpose.msra.mxu0 0
        %2069 = vmatprep.subr.bf16.mxu0 0
        %2070 = vmatpush1.bf16.xpose.msra.mxu0 0
        %2071 = vmatprep.subr.bf16.mxu0 0
        %2072 = vmatpush1.bf16.xpose.msra.mxu0 0
        %2073 = vmatprep.subr.bf16.mxu0 0
        %2074 = vmatpush1.bf16.xpose.msra.mxu0 0
        %2075 = vmatprep.mubr.bf16.mxu0 0
        %2076 = vmatmul.mubr.bf16.gmra.mrb[0].mxu0 %v2017
        %v2077 = vpop.f32.mrb[0].mxu0
        %v2078 = vadd.f32 %v1968, %v2077
        %v2079 = vpop.f32.mrb[0].mxu0
        %v2080 = vpop.f32.mrb[0].mxu0
        %v2081 = vadd.f32 %v1973, %v2080
        %v2082 = vpop.f32.mrb[0].mxu0
        %2083 = vdwg.mxu0
        %v2084 = vxor.u32 %v2078, 2147483648
        %v2085 = vxor.u32 %v2081, 2147483648
        %v2086 = vmul.f32 %v2084, 1.442695
        %v2087 = vpow.pop %v2086
        %v2088 = vmul.f32 %v2085, 1.442695
        %v2089 = vpow.pop %v2088
        %v2090 = vadd.f32 %v2087, 1.0
        %v2091 = vadd.f32 %v2089, 1.0
        %v2092 = vrcp.pop %v2090
        %v2093 = vmul.f32 1.0, %v2092
        %v2094 = vrcp.pop %v2091
        %v2095 = vmul.f32 1.0, %v2094
        %v2096 = vld [vmem:[%s7] sm:$0xf]
        %v2097 = vld [vmem:[%s7 + $0x4] sm:$0xf]
        %v2098 = vld [vmem:[%s7 + $0x8] sm:$0xf]
        %v2099 = vld [vmem:[%s7 + $0xc] sm:$0xf]
        %v2100 = vld [vmem:[%s7 + $0x10] sm:$0xf]
        %v2101 = vld [vmem:[%s7 + $0x14] sm:$0xf]
        %v2102 = vld [vmem:[%s7 + $0x18] sm:$0xf]
        %v2103 = vld [vmem:[%s7 + $0x1c] sm:$0xf]
        %v2104 = vld [vmem:[%s8] sm:$0xff]
        %v2105 = vld [vmem:[%s8 + $0x8] sm:$0xff]
        %2107 = vset.pattern.permute.xlu0 0
        %2108 = vperm.xlu0 %2107, %v2104
        %v2109 = vpop.permute.xlu0 %2108
        %2112 = vset.pattern.permute.xlu0 0
        %2113 = vperm.xlu0 %2112, %v2105
        %v2114 = vpop.permute.xlu0 %2113
        %v2124 = vunpack.c.l.b16 %v2096
        %v2125 = vunpack.c.l.b16 %v2097
        %v2126 = vunpack.c.l.b16 %v2098
        %v2127 = vunpack.c.l.b16 %v2099
        %v2128 = vunpack.c.l.b16 %v2100
        %v2129 = vunpack.c.l.b16 %v2101
        %v2130 = vunpack.c.l.b16 %v2102
        %v2131 = vunpack.c.l.b16 %v2103
        %v2132 = vpack.c.b16 %v2125, %v2124
        %v2133 = vpack.c.b16 %v2127, %v2126
        %v2134 = vpack.c.b16 %v2129, %v2128
        %v2135 = vpack.c.b16 %v2131, %v2130
        %2140 = vxpose.xlu0.c.b16.start [1/8] %v2132, 128
        %2141 = vxpose.xlu0.c.b16.cont [2/8] %v2133, 128
        %2142 = vxpose.xlu0.c.b16.cont [3/8] %v2134, 128
        %2143 = vxpose.xlu0.c.b16.cont [4/8] %v2135, 128
        %2144 = vxpose.xlu0.c.b16.cont [5/8] 0, 128
        %2145 = vxpose.xlu0.c.b16.cont [6/8] 0, 128
        %2146 = vxpose.xlu0.c.b16.cont [7/8] 0, 128
        %2147 = vxpose.xlu0.c.b16.end [8/8] 0, 128
        %v2148 = vpop.trf.xlu0
        %v2149 = vpop.trf.xlu0
        %v2150 = vpop.trf.xlu0
        %v2151 = vpop.trf.xlu0
        %v2152 = vpop.trf.xlu0
        %v2153 = vpop.trf.xlu0
        %v2154 = vpop.trf.xlu0
        %v2155 = vpop.trf.xlu0
        %v2157 = vsel %vm2015, %v2148, 0
        %2159 = vmatprep.subr.bf16.mxu0 0
        %2160 = vmatpush1.bf16.xpose.msra.mxu0 %v2020
        %2161 = vmatprep.subr.bf16.mxu0 0
        %2162 = vmatpush1.bf16.xpose.msra.mxu0 %v2023
        %2163 = vmatprep.subr.bf16.mxu0 0
        %2164 = vmatpush1.bf16.xpose.msra.mxu0 %v2026
        %2165 = vmatprep.subr.bf16.mxu0 0
        %2166 = vmatpush1.bf16.xpose.msra.mxu0 %v2029
        %2167 = vmatprep.subr.bf16.mxu0 0
        %2168 = vmatpush1.bf16.xpose.msra.mxu0 %v2032
        %2169 = vmatprep.subr.bf16.mxu0 0
        %2170 = vmatpush1.bf16.xpose.msra.mxu0 %v2035
        %2171 = vmatprep.subr.bf16.mxu0 0
        %2172 = vmatpush1.bf16.xpose.msra.mxu0 %v2038
        %2173 = vmatprep.subr.bf16.mxu0 0
        %2174 = vmatpush1.bf16.xpose.msra.mxu0 %v2041
        %2175 = vmatprep.subr.bf16.mxu0 0
        %2176 = vmatpush1.bf16.xpose.msra.mxu0 0
        %2177 = vmatprep.subr.bf16.mxu0 0
        %2178 = vmatpush1.bf16.xpose.msra.mxu0 0
        %2179 = vmatprep.subr.bf16.mxu0 0
        %2180 = vmatpush1.bf16.xpose.msra.mxu0 0
        %2181 = vmatprep.subr.bf16.mxu0 0
        %2182 = vmatpush1.bf16.xpose.msra.mxu0 0
        %2183 = vmatprep.subr.bf16.mxu0 0
        %2184 = vmatpush1.bf16.xpose.msra.mxu0 0
        %2185 = vmatprep.subr.bf16.mxu0 0
        %2186 = vmatpush1.bf16.xpose.msra.mxu0 0
        %2187 = vmatprep.subr.bf16.mxu0 0
        %2188 = vmatpush1.bf16.xpose.msra.mxu0 0
        %2189 = vmatprep.subr.bf16.mxu0 0
        %2190 = vmatpush1.bf16.xpose.msra.mxu0 0
        %2191 = vmatprep.mubr.bf16.mxu0 0
        %2192 = vmatmul.mubr.bf16.gmra.mrb[0].mxu0 %v2157
        %v2193 = vpop.f32.mrb[0].mxu0
        %v2194 = vadd.f32 %v2109, %v2193
        %v2195 = vpop.f32.mrb[0].mxu0
        %v2196 = vpop.f32.mrb[0].mxu0
        %v2197 = vadd.f32 %v2114, %v2196
        %v2198 = vpop.f32.mrb[0].mxu0
        %2199 = vdwg.mxu0
        %v2200 = vmax.f32 %v2194, %v2197
        %v2201 = vrot.slane %v2200, 4
        %v2202 = vmax.f32 %v2200, %v2201
        %v2203 = vrot.slane %v2202, 2
        %v2204 = vmax.f32 %v2202, %v2203
        %v2205 = vrot.slane %v2204, 1
        %v2206 = vmax.f32 %v2204, %v2205
        %v2207 = vsub.f32 %v2194, %v2206
        %v2208 = vsub.f32 %v2197, %v2206
        %v2209 = vmul.f32 %v2207, 1.442695
        %v2210 = vpow.pop %v2209
        %v2211 = vmul.f32 %v2208, 1.442695
        %v2212 = vpow.pop %v2211
        %v2213 = vadd.f32 %v2210, %v2212
        %v2214 = vrot.slane %v2213, 4
        %v2215 = vadd.f32 %v2213, %v2214
        %v2216 = vrot.slane %v2215, 2
        %v2217 = vadd.f32 %v2215, %v2216
        %v2218 = vrot.slane %v2217, 1
        %v2219 = vadd.f32 %v2217, %v2218
        %v2220 = vrcp.pop %v2219
        %v2221 = vmul.f32 %v2210, %v2220
        %v2222 = vmul.f32 %v2212, %v2220
        %v2223 = vmax.f32 %v2221, 1e-07
        %v2224 = vmax.f32 %v2222, 1e-07
        %v2225 = vmin.f32 %v2223, 1.0
        %v2226 = vmin.f32 %v2224, 1.0
        %v2227 = vld [vmem:[#allocation2] sm:$0xff]
        %v2228 = vld [vmem:[#allocation2 + $0x8] sm:$0xff]
        %v2229 = vmul.f32 %v2093, %v2225
        %v2230 = vmul.f32 %v2095, %v2226
        %2231 = vadd.xlane.f32.xlu0 %v2229
        %v2232 = vpop.xlane.xlu0 %2231
        %2233 = vadd.xlane.f32.xlu0 %v2230
        %v2234 = vpop.xlane.xlu0 %2233
        %v2235 = vadd.f32 %v2227, %v2232
        %v2236 = vadd.f32 %v2228, %v2234
        %vm2237 = vcmask 7168
        %2238 = vst.msk [vmem:[#allocation2] sm:$0xff] %vm2237, %v2235
        %2239 = vst.msk [vmem:[#allocation2 + $0x8] sm:$0xff] %vm2237, %v2236
        %v2240 = vld [vmem:[#allocation3] sm:$0xff]
        %v2241 = vld [vmem:[#allocation3 + $0x8] sm:$0xff]
        %2242 = vadd.xlane.f32.xlu0 %v2225
        %v2243 = vpop.xlane.xlu0 %2242
        %2244 = vadd.xlane.f32.xlu0 %v2226
        %v2245 = vpop.xlane.xlu0 %2244
        %v2246 = vadd.f32 %v2240, %v2243
        %v2247 = vadd.f32 %v2241, %v2245
        %2248 = vst.msk [vmem:[#allocation3] sm:$0xff] %vm2237, %v2246
        %2249 = vst.msk [vmem:[#allocation3 + $0x8] sm:$0xff] %vm2237, %v2247
        %2250 = vst [vmem:[%s412] sm:$0xff] %v2093
        %2251 = vst [vmem:[%s412 + $0x8] sm:$0xff] %v2095
        %p2252 = scmp.eq.s32.totalorder %s34, 1
        // Predicated region
        $region69: #{tpu_custom_call.1} parent=55 // pred_check
          %p2253 = pneg %p2252
        $region70: #{tpu_custom_call.1} parent=55 // pred_check_branch
          %2255 = sbr.rel (%p2253) target = $region72
        $region71: #{tpu_custom_call.1} parent=55 // pred_region
          %v2256 = vld [vmem:[#allocation2] sm:$0xff]
          %v2257 = vld [vmem:[#allocation2 + $0x8] sm:$0xff]
          %v2258 = vld [vmem:[#allocation3] sm:$0xff]
          %v2259 = vld [vmem:[#allocation3 + $0x8] sm:$0xff]
          %v2260 = vrcp.pop %v2258
          %v2261 = vmul.f32 %v2256, %v2260
          %v2262 = vrcp.pop %v2259
          %v2263 = vmul.f32 %v2257, %v2262
          %2264 = vst.msk [vmem:[%s425] sm:$0xff] %vm2237, %v2261
          %2265 = vst.msk [vmem:[%s425 + $0x8] sm:$0xff] %vm2237, %v2263
        $region72: #{tpu_custom_call.1} parent=55 // pred_fallthru
          _
        %s2266 = sand.u32 %s247, 1
        %s2267 = scalar_lea.sflag [#allocation6], %s2266
        %s2268 = sand.u32 %s247, 1
        %s2269 = smul.addr %s2268, 16
        %s2270 = scalar_lea.vmem [#allocation9], %s2269
        %p2271 = scmp.lt.s32.totalorder %s33, 1
        %s2272 = scalar_select %p2271, %s33, 1
        %s2273 = smul.addr %s2272, 2
        %s2274 = smul.addr %s2273, 8
        %s2275 = scalar_lea.vmem %s10, %s2274
        // Predicated region
        $region73: #{tpu_custom_call.1} parent=55 // pred_check
          %p2276 = pneg %p257
        $region74: #{tpu_custom_call.1} parent=55 // pred_check_branch
          %2278 = sbr.rel (%p2276) target = $region76
        $region75: #{tpu_custom_call.1} parent=55 // pred_region
          %s2280 = ssub.s32 256, 256
          %2281 = vsyncadd %s2267, %s2280
          %s2282 = smul.addr %s33, 4
          %s2283 = sadd.s32 %s34, %s2282
          %s2284 = smul.addr %s2283, 128
          %s2285 = scalar_lea.hbm %s9, %s2284
          %s2286 = sshll.u32 %s2270, 4
          %s2287 = int_to_ptr.vmem [resolvable:$true] %s2286
          %2292 = dma.vmem_to_hbm [thread:$0]  %s2287, 256, %s2285, %s2267, 128, 256, 8
        $region76: #{tpu_custom_call.1} parent=55 // pred_fallthru
          _
        // Predicated region
        $region77: #{tpu_custom_call.1} parent=55 // pred_check
          %p2293 = pneg %p283
        $region78: #{tpu_custom_call.1} parent=55 // pred_check_branch
          %2295 = sbr.rel (%p2293) target = $region80
        $region79: #{tpu_custom_call.1} parent=55 // pred_region
          _
        $region80: #{tpu_custom_call.1} parent=55 // pred_fallthru
          _
      $region56: #{tpu_custom_call.1} parent=5 // pred_fallthru
        _
      %p2296 = scmp.le.s32.totalorder 2, %s24
      // Predicated region
      $region81: #{tpu_custom_call.1} parent=5 // pred_check
        %p2297 = pneg %p2296
      $region82: #{tpu_custom_call.1} parent=5 // pred_check_branch
        %2299 = sbr.rel (%p2297) target = $region84
      $region83: #{tpu_custom_call.1} parent=5 // pred_region
        %s2300 = ssub.s32 %s24, 2
        // Predicated region
        $region85: #{tpu_custom_call.1} parent=83 // pred_check
          %p2301 = pneg %p263
        $region86: #{tpu_custom_call.1} parent=83 // pred_check_branch
          %2303 = sbr.rel (%p2301) target = $region88
        $region87: #{tpu_custom_call.1} parent=83 // pred_region
          %s2304 = sand.u32 %s248, 1
          %s2305 = scalar_lea.sflag [#allocation6], %s2304
          %s2306 = sand.u32 %s248, 1
          %s2307 = smul.addr %s2306, 16
          %s2308 = scalar_lea.vmem [#allocation9], %s2307
          %2309 = dma.done %s2305, 256
        $region88: #{tpu_custom_call.1} parent=83 // pred_fallthru
          _
        // Predicated region
        $region89: #{tpu_custom_call.1} parent=83 // pred_check
          %p2310 = pneg %p289
        $region90: #{tpu_custom_call.1} parent=83 // pred_check_branch
          %2312 = sbr.rel (%p2310) target = $region92
        $region91: #{tpu_custom_call.1} parent=83 // pred_region
          %p2313 = scmp.lt.s32.totalorder %s35, 1
          %s2314 = scalar_select %p2313, %s35, 1
          %s2315 = smul.addr %s2314, 2
          %s2316 = smul.addr %s2315, 8
          %s2317 = scalar_lea.vmem %s10, %s2316
        $region92: #{tpu_custom_call.1} parent=83 // pred_fallthru
          _
      $region84: #{tpu_custom_call.1} parent=5 // pred_fallthru
        _
    $region6: #{tpu_custom_call.1} parent=1 // loop_footer
      %s28 = sadd.s32 1, %s24
    $region7: #{tpu_custom_call.1} parent=1 // loop_footer_branch
      %23 = sbr.rel target = $region3
    $region8: #{tpu_custom_call.1} parent=1 // loop_exit
      _
    %2318 = vsyncpa [#allocation5], 1
    %s2319 = scalar_lea.sflag [#allocation5], 1
    %2320 = vsyncpa %s2319, 1
    %2321 = vsyncpa [#allocation8], 1
    %2322 = vsyncpa [#allocation6], 1
    %s2323 = scalar_lea.sflag [#allocation6], 1
    %2324 = vsyncpa %s2323, 1

</llo_original>
